<compile_context>
chip_gen: v5e
topology: v5e:2x2
jax: 0.10.0
libtpu: 0.0.40
codegen_flags: <defaults>
</compile_context>

<pallas_src>
import jax
import jax.numpy as jnp
from jax.experimental import pallas as pl
from jax.experimental.pallas import tpu as pltpu


# ----------------------------------------------------------------------------
# Kernel
# ----------------------------------------------------------------------------
def soc_kernel(x_ref,        # (T*Bp, I)   flattened, time-major input
               w_xr_ref,     # (I, Hp)     RNN input->hidden weight
               b_r_ref,      # (1, Hp)     RNN bias (b_ih + b_hh)
               w_hr_ref,     # (Hp, Hp)    RNN hidden->hidden weight
               w_ihl_ref,    # (Hp, 4Hp)   LSTM input->hidden weight (i,f,g,o)
               w_hhl_ref,    # (Hp, 4Hp)   LSTM hidden->hidden weight (i,f,g,o)
               b_l_ref,      # (1, 4Hp)    LSTM bias (b_ih + b_hh)
               w_fc_ref,     # (Hp, O)     final Linear weight
               b_fc_ref,     # (1, O)      final Linear bias
               out_ref,      # (Bp, O)
               hbuf_ref,     # scratch (T*Bp, Hp):  x-projection, then rnn_out
               gates_ref):   # scratch (T*Bp, 4Hp): hoisted LSTM input gates
    H = w_hr_ref.shape[0]
    B = out_ref.shape[0]
    TB = hbuf_ref.shape[0]
    T = TB // B
    # Full unroll only while it is cheap; bounded unroll keeps LLO scheduler
    # visibility without code-size / vreg live-range blowup for long T.
    unroll = True if T <= 16 else 4

    # ---- Pass 1a: hoisted RNN input projection (one batched MXU matmul).
    hbuf_ref[...] = (jnp.dot(x_ref[...], w_xr_ref[...],
                             preferred_element_type=jnp.float32)
                     + b_r_ref[...])

    # Tiny weights: load once, stay resident across both recurrences.
    w_hr = w_hr_ref[...]
    w_hhl = w_hhl_ref[...]

    h0 = jnp.zeros((B, H), jnp.float32)

    # ---- Pass 1b: Elman RNN recurrence; write h_r[t] back in place.
    def rnn_step(t, h_r):
        row = pl.multiple_of(t * B, B)                 # sublane-aligned slab
        h_r = jnp.tanh(hbuf_ref[pl.ds(row, B), :]
                       + jnp.dot(h_r, w_hr, preferred_element_type=jnp.float32))
        hbuf_ref[pl.ds(row, B), :] = h_r               # slab t already consumed
        return h_r

    jax.lax.fori_loop(0, T, rnn_step, h0, unroll=unroll)

    # ---- Pass 2: hoisted LSTM input-side gates (one batched MXU matmul).
    gates_ref[...] = (jnp.dot(hbuf_ref[...], w_ihl_ref[...],
                              preferred_element_type=jnp.float32)
                      + b_l_ref[...])

    # sigmoid(x) == 0.5 * tanh(0.5 * x) + 0.5 : one EUP op + cheap VPU ops,
    # avoids a potential exp + divide lowering on the serial chain.
    def sigmoid(v):
        return 0.5 * jnp.tanh(0.5 * v) + 0.5

    # ---- Pass 3: LSTM recurrence; only h_l @ W_hh on the dependent chain.
    def lstm_step(t, carry):
        h_l, c_l = carry
        row = pl.multiple_of(t * B, B)
        gates = (gates_ref[pl.ds(row, B), :]
                 + jnp.dot(h_l, w_hhl, preferred_element_type=jnp.float32))
        i_g = sigmoid(gates[:, 0 * H:1 * H])
        f_g = sigmoid(gates[:, 1 * H:2 * H])
        g_g = jnp.tanh(gates[:, 2 * H:3 * H])
        o_g = sigmoid(gates[:, 3 * H:4 * H])
        c_l = f_g * c_l + i_g * g_g
        h_l = o_g * jnp.tanh(c_l)
        return (h_l, c_l)

    h_last, _ = jax.lax.fori_loop(0, T, lstm_step, (h0, h0), unroll=unroll)

    # ---- Final Linear on the last timestep's LSTM hidden (lane-dense store).
    out_ref[...] = (jnp.dot(h_last, w_fc_ref[...],
                            preferred_element_type=jnp.float32)
                    + b_fc_ref[...]).astype(out_ref.dtype)


# ----------------------------------------------------------------------------
# Wrapper: padding / layout plumbing + pallas_call
# ----------------------------------------------------------------------------
def _round_up(n, m):
    return ((n + m - 1) // m) * m


def _pad2(a, rows, cols):
    return jnp.pad(a, ((0, rows - a.shape[0]), (0, cols - a.shape[1])))


def _pad_gate_cols(w, H, Hp):
    """(..., 4H) -> (..., 4Hp): pad each gate block (i,f,g,o) to Hp lanes."""
    parts = []
    for k in range(4):
        g = w[..., k * H:(k + 1) * H]
        pad = [(0, 0)] * (w.ndim - 1) + [(0, Hp - H)]
        parts.append(jnp.pad(g, pad))
    return jnp.concatenate(parts, axis=-1)


def soc_forward(x, params):
    B, T, I = x.shape
    H = params["w_hh_rnn"].shape[0]
    O = params["w_fc"].shape[1]

    Bp = _round_up(B, 8)      # sublane width
    Hp = _round_up(H, 128)    # lane width -> vreg-aligned gate blocks
    Op = _round_up(O, 128)    # lane-dense output store

    # x: (B, T, I) -> time-major, batch padded, flattened to (T*Bp, I) so each
    # timestep is a dense sublane-aligned slab and the hoisted projections are
    # single batched matmuls.
    x_p = jnp.pad(x, ((0, Bp - B), (0, 0), (0, 0)))
    x_flat = jnp.transpose(x_p, (1, 0, 2)).reshape(T * Bp, I)

    # Zero-padding of the extra hidden/output *columns* keeps the valid
    # region's math identical to the unpadded model.  (Padded *batch rows* do
    # pick up broadcast biases, but rows never mix and are sliced off below.)
    w_xr = _pad2(params["w_ih_rnn"], I, Hp)
    b_r = _pad2(params["b_rnn"], 1, Hp)
    w_hr = _pad2(params["w_hh_rnn"], Hp, Hp)

    w_ihl = _pad2(_pad_gate_cols(params["w_ih_lstm"], H, Hp), Hp, 4 * Hp)
    w_hhl = _pad2(_pad_gate_cols(params["w_hh_lstm"], H, Hp), Hp, 4 * Hp)
    b_l = _pad_gate_cols(params["b_lstm"], H, Hp)             # (1, 4Hp)

    w_fc = _pad2(params["w_fc"], Hp, Op)
    b_fc = _pad2(params["b_fc"], 1, Op)

    vmem = pl.BlockSpec(memory_space=pltpu.MemorySpace.VMEM)
    inputs = (x_flat, w_xr, b_r, w_hr, w_ihl, w_hhl, b_l, w_fc, b_fc)

    # Explicit VMEM budget: all-resident inputs + the two scratches + headroom.
    scratch_bytes = 4 * (T * Bp * Hp + T * Bp * 4 * Hp)
    in_bytes = sum(a.size * a.dtype.itemsize for a in inputs) + 4 * Bp * Op
    vmem_limit = int(min(max(2 * (in_bytes + scratch_bytes), 32 << 20), 64 << 20))

    # TODO(synk): T==0 is unguarded (PyTorch would also fail); for very large T
    # the hbuf/gates scratches must be time-chunked (stream x with a grid or
    # emit_pipeline) and for large batch a 'parallel' batch grid axis would use
    # both v7x TensorCores.
    out_p = pl.pallas_call(
        soc_kernel,
        out_shape=jax.ShapeDtypeStruct((Bp, Op), jnp.float32),
        in_specs=[vmem] * len(inputs),
        out_specs=vmem,
        scratch_shapes=[pltpu.VMEM((T * Bp, Hp), jnp.float32),
                        pltpu.VMEM((T * Bp, 4 * Hp), jnp.float32)],
        compiler_params=pltpu.CompilerParams(vmem_limit_bytes=vmem_limit),
    )(*inputs)

    return out_p[:B, :O]


# ----------------------------------------------------------------------------
# Parameter init (PyTorch-style, weights stored pre-transposed) and reference
# ----------------------------------------------------------------------------
def init_params(key, input_size, hidden_size, output_size):
    ks = jax.random.split(key, 10)
    bound = 1.0 / jnp.sqrt(hidden_size)
    u = lambda k, shape, b: jax.random.uniform(k, shape, jnp.float32, -b, b)
    H, I, O = hidden_size, input_size, output_size
    return {
        # RNN (torch W_ih: (H,I), W_hh: (H,H) -> transposed here)
        "w_ih_rnn": u(ks[0], (I, H), bound),
        "w_hh_rnn": u(ks[1], (H, H), bound),
        "b_rnn": u(ks[2], (1, H), bound) + u(ks[3], (1, H), bound),
        # LSTM (gate order i,f,g,o)
        "w_ih_lstm": u(ks[4], (H, 4 * H), bound),
        "w_hh_lstm": u(ks[5], (H, 4 * H), bound),
        "b_lstm": u(ks[6], (1, 4 * H), bound) + u(ks[7], (1, 4 * H), bound),
        # Linear
        "w_fc": u(ks[8], (H, O), bound),
        "b_fc": u(ks[9], (1, O), bound),
    }


def reference_forward(x, p):
    """Pure-JAX reference matching torch semantics."""
    B, T, I = x.shape
    H = p["w_hh_rnn"].shape[0]

    def rnn_step(h, x_t):
        h = jnp.tanh(x_t @ p["w_ih_rnn"] + h @ p["w_hh_rnn"] + p["b_rnn"])
        return h, h

    _, rnn_out = jax.lax.scan(rnn_step, jnp.zeros((B, H), jnp.float32),
                              jnp.swapaxes(x, 0, 1))

    def lstm_step(carry, x_t):
        h, c = carry
        g = x_t @ p["w_ih_lstm"] + h @ p["w_hh_lstm"] + p["b_lstm"]
        i = jax.nn.sigmoid(g[:, 0 * H:1 * H])
        f = jax.nn.sigmoid(g[:, 1 * H:2 * H])
        gg = jnp.tanh(g[:, 2 * H:3 * H])
        o = jax.nn.sigmoid(g[:, 3 * H:4 * H])
        c = f * c + i * gg
        h = o * jnp.tanh(c)
        return (h, c), h

    (h_last, _), _ = jax.lax.scan(
        lstm_step,
        (jnp.zeros((B, H), jnp.float32), jnp.zeros((B, H), jnp.float32)),
        rnn_out)
    return h_last @ p["w_fc"] + p["b_fc"]


if __name__ == "__main__":
    B, T, I, H, O = 2, 8, 4, 32, 1
    key = jax.random.PRNGKey(0)
    k_x, k_p = jax.random.split(key)
    x = jax.random.normal(k_x, (B, T, I), jnp.float32)
    params = init_params(k_p, I, H, O)

    out = jax.block_until_ready(soc_forward(x, params))
    ref = reference_forward(x, params)

    assert out.shape == (B, O)
    # Slightly loosened tolerance: kernel uses tanh-based sigmoid and MXU-pass
    # f32 matmuls; reference uses jax.nn.sigmoid + XLA default precision.
    assert jnp.allclose(out, ref, atol=1e-4, rtol=1e-4), (out, ref)
    print("KERNEL_OK")
</pallas_src>

<mosaic_0001>
module attributes {stable_mosaic.version = 11 : i64} {
  func.func @soc_kernel(%arg0: memref<64x4xf32, #tpu.memory_space<vmem>>, %arg1: memref<4x128xf32, #tpu.memory_space<vmem>>, %arg2: memref<1x128xf32, #tpu.memory_space<vmem>>, %arg3: memref<128x128xf32, #tpu.memory_space<vmem>>, %arg4: memref<128x512xf32, #tpu.memory_space<vmem>>, %arg5: memref<128x512xf32, #tpu.memory_space<vmem>>, %arg6: memref<1x512xf32, #tpu.memory_space<vmem>>, %arg7: memref<128x128xf32, #tpu.memory_space<vmem>>, %arg8: memref<1x128xf32, #tpu.memory_space<vmem>>, %arg9: memref<8x128xf32, #tpu.memory_space<vmem>>, %arg10: memref<64x128xf32, #tpu.memory_space<vmem>>, %arg11: memref<64x512xf32, #tpu.memory_space<vmem>>) attributes {dimension_semantics = [], scalar_prefetch = 0 : i64, scratch_operands = 2 : i64, tpu.core_type = #tpu.core_type<tc>} {
    %c0 = arith.constant 0 : index
    %c0_0 = arith.constant 0 : index
    %0 = vector.load %arg0[%c0, %c0_0] : memref<64x4xf32, #tpu.memory_space<vmem>>, vector<64x4xf32>
    %c0_1 = arith.constant 0 : index
    %c0_2 = arith.constant 0 : index
    %1 = vector.load %arg1[%c0_1, %c0_2] : memref<4x128xf32, #tpu.memory_space<vmem>>, vector<4x128xf32>
    %cst = arith.constant dense<0.000000e+00> : vector<64x128xf32>
    %2 = tpu.matmul %0, %1, %cst {dimension_numbers = #tpu.dot_dimension_numbers<[1], [0], [0], [1], [0, 0, 1, 1], [], []>} : vector<64x4xf32>, vector<4x128xf32>, vector<64x128xf32> -> vector<64x128xf32>
    %c0_3 = arith.constant 0 : index
    %c0_4 = arith.constant 0 : index
    %3 = vector.load %arg2[%c0_3, %c0_4] : memref<1x128xf32, #tpu.memory_space<vmem>>, vector<1x128xf32>
    %4 = vector.broadcast %3 : vector<1x128xf32> to vector<64x128xf32>
    %5 = arith.addf %2, %4 : vector<64x128xf32>
    %c0_5 = arith.constant 0 : index
    %c0_6 = arith.constant 0 : index
    %6 = vector.load %arg10[%c0_5, %c0_6] : memref<64x128xf32, #tpu.memory_space<vmem>>, vector<64x128xf32>
    tpu.vector_store %arg10[%c0_5, %c0_6], %5 {strides = array<i32>} : memref<64x128xf32, #tpu.memory_space<vmem>>, vector<64x128xf32>,
    %c0_7 = arith.constant 0 : index
    %c0_8 = arith.constant 0 : index
    %7 = vector.load %arg3[%c0_7, %c0_8] : memref<128x128xf32, #tpu.memory_space<vmem>>, vector<128x128xf32>
    %c0_9 = arith.constant 0 : index
    %c0_10 = arith.constant 0 : index
    %8 = vector.load %arg5[%c0_9, %c0_10] : memref<128x512xf32, #tpu.memory_space<vmem>>, vector<128x512xf32>
    %cst_11 = arith.constant 0.000000e+00 : f32
    %9 = vector.broadcast %cst_11 : f32 to vector<8x128xf32>
    %c0_i32 = arith.constant 0 : i32
    %c8_i32 = arith.constant 8 : i32
    %10 = arith.muli %c0_i32, %c8_i32 : i32
    %11 = tpu.assume_multiple %10, 8 : i32
    %12 = arith.index_cast %11 : i32 to index
    %c0_12 = arith.constant 0 : index
    %13 = vector.load %arg10[%12, %c0_12] : memref<64x128xf32, #tpu.memory_space<vmem>>, vector<8x128xf32>
    %cst_13 = arith.constant dense<0.000000e+00> : vector<8x128xf32>
    %14 = tpu.matmul %9, %7, %cst_13 {dimension_numbers = #tpu.dot_dimension_numbers<[1], [0], [0], [1], [0, 0, 1, 1], [], []>} : vector<8x128xf32>, vector<128x128xf32>, vector<8x128xf32> -> vector<8x128xf32>
    %15 = arith.addf %13, %14 : vector<8x128xf32>
    %16 = math.tanh %15 : vector<8x128xf32>
    %17 = arith.index_cast %11 : i32 to index
    %c0_14 = arith.constant 0 : index
    %18 = vector.load %arg10[%17, %c0_14] : memref<64x128xf32, #tpu.memory_space<vmem>>, vector<8x128xf32>
    tpu.vector_store %arg10[%17, %c0_14], %16 {strides = array<i32>} : memref<64x128xf32, #tpu.memory_space<vmem>>, vector<8x128xf32>,
    %c1_i32 = arith.constant 1 : i32
    %c8_i32_15 = arith.constant 8 : i32
    %19 = arith.muli %c1_i32, %c8_i32_15 : i32
    %20 = tpu.assume_multiple %19, 8 : i32
    %21 = arith.index_cast %20 : i32 to index
    %c0_16 = arith.constant 0 : index
    %22 = vector.load %arg10[%21, %c0_16] : memref<64x128xf32, #tpu.memory_space<vmem>>, vector<8x128xf32>
    %cst_17 = arith.constant dense<0.000000e+00> : vector<8x128xf32>
    %23 = tpu.matmul %16, %7, %cst_17 {dimension_numbers = #tpu.dot_dimension_numbers<[1], [0], [0], [1], [0, 0, 1, 1], [], []>} : vector<8x128xf32>, vector<128x128xf32>, vector<8x128xf32> -> vector<8x128xf32>
    %24 = arith.addf %22, %23 : vector<8x128xf32>
    %25 = math.tanh %24 : vector<8x128xf32>
    %26 = arith.index_cast %20 : i32 to index
    %c0_18 = arith.constant 0 : index
    %27 = vector.load %arg10[%26, %c0_18] : memref<64x128xf32, #tpu.memory_space<vmem>>, vector<8x128xf32>
    tpu.vector_store %arg10[%26, %c0_18], %25 {strides = array<i32>} : memref<64x128xf32, #tpu.memory_space<vmem>>, vector<8x128xf32>,
    %c2_i32 = arith.constant 2 : i32
    %c8_i32_19 = arith.constant 8 : i32
    %28 = arith.muli %c2_i32, %c8_i32_19 : i32
    %29 = tpu.assume_multiple %28, 8 : i32
    %30 = arith.index_cast %29 : i32 to index
    %c0_20 = arith.constant 0 : index
    %31 = vector.load %arg10[%30, %c0_20] : memref<64x128xf32, #tpu.memory_space<vmem>>, vector<8x128xf32>
    %cst_21 = arith.constant dense<0.000000e+00> : vector<8x128xf32>
    %32 = tpu.matmul %25, %7, %cst_21 {dimension_numbers = #tpu.dot_dimension_numbers<[1], [0], [0], [1], [0, 0, 1, 1], [], []>} : vector<8x128xf32>, vector<128x128xf32>, vector<8x128xf32> -> vector<8x128xf32>
    %33 = arith.addf %31, %32 : vector<8x128xf32>
    %34 = math.tanh %33 : vector<8x128xf32>
    %35 = arith.index_cast %29 : i32 to index
    %c0_22 = arith.constant 0 : index
    %36 = vector.load %arg10[%35, %c0_22] : memref<64x128xf32, #tpu.memory_space<vmem>>, vector<8x128xf32>
    tpu.vector_store %arg10[%35, %c0_22], %34 {strides = array<i32>} : memref<64x128xf32, #tpu.memory_space<vmem>>, vector<8x128xf32>,
    %c3_i32 = arith.constant 3 : i32
    %c8_i32_23 = arith.constant 8 : i32
    %37 = arith.muli %c3_i32, %c8_i32_23 : i32
    %38 = tpu.assume_multiple %37, 8 : i32
    %39 = arith.index_cast %38 : i32 to index
    %c0_24 = arith.constant 0 : index
    %40 = vector.load %arg10[%39, %c0_24] : memref<64x128xf32, #tpu.memory_space<vmem>>, vector<8x128xf32>
    %cst_25 = arith.constant dense<0.000000e+00> : vector<8x128xf32>
    %41 = tpu.matmul %34, %7, %cst_25 {dimension_numbers = #tpu.dot_dimension_numbers<[1], [0], [0], [1], [0, 0, 1, 1], [], []>} : vector<8x128xf32>, vector<128x128xf32>, vector<8x128xf32> -> vector<8x128xf32>
    %42 = arith.addf %40, %41 : vector<8x128xf32>
    %43 = math.tanh %42 : vector<8x128xf32>
    %44 = arith.index_cast %38 : i32 to index
    %c0_26 = arith.constant 0 : index
    %45 = vector.load %arg10[%44, %c0_26] : memref<64x128xf32, #tpu.memory_space<vmem>>, vector<8x128xf32>
    tpu.vector_store %arg10[%44, %c0_26], %43 {strides = array<i32>} : memref<64x128xf32, #tpu.memory_space<vmem>>, vector<8x128xf32>,
    %c4_i32 = arith.constant 4 : i32
    %c8_i32_27 = arith.constant 8 : i32
    %46 = arith.muli %c4_i32, %c8_i32_27 : i32
    %47 = tpu.assume_multiple %46, 8 : i32
    %48 = arith.index_cast %47 : i32 to index
    %c0_28 = arith.constant 0 : index
    %49 = vector.load %arg10[%48, %c0_28] : memref<64x128xf32, #tpu.memory_space<vmem>>, vector<8x128xf32>
    %cst_29 = arith.constant dense<0.000000e+00> : vector<8x128xf32>
    %50 = tpu.matmul %43, %7, %cst_29 {dimension_numbers = #tpu.dot_dimension_numbers<[1], [0], [0], [1], [0, 0, 1, 1], [], []>} : vector<8x128xf32>, vector<128x128xf32>, vector<8x128xf32> -> vector<8x128xf32>
    %51 = arith.addf %49, %50 : vector<8x128xf32>
    %52 = math.tanh %51 : vector<8x128xf32>
    %53 = arith.index_cast %47 : i32 to index
    %c0_30 = arith.constant 0 : index
    %54 = vector.load %arg10[%53, %c0_30] : memref<64x128xf32, #tpu.memory_space<vmem>>, vector<8x128xf32>
    tpu.vector_store %arg10[%53, %c0_30], %52 {strides = array<i32>} : memref<64x128xf32, #tpu.memory_space<vmem>>, vector<8x128xf32>,
    %c5_i32 = arith.constant 5 : i32
    %c8_i32_31 = arith.constant 8 : i32
    %55 = arith.muli %c5_i32, %c8_i32_31 : i32
    %56 = tpu.assume_multiple %55, 8 : i32
    %57 = arith.index_cast %56 : i32 to index
    %c0_32 = arith.constant 0 : index
    %58 = vector.load %arg10[%57, %c0_32] : memref<64x128xf32, #tpu.memory_space<vmem>>, vector<8x128xf32>
    %cst_33 = arith.constant dense<0.000000e+00> : vector<8x128xf32>
    %59 = tpu.matmul %52, %7, %cst_33 {dimension_numbers = #tpu.dot_dimension_numbers<[1], [0], [0], [1], [0, 0, 1, 1], [], []>} : vector<8x128xf32>, vector<128x128xf32>, vector<8x128xf32> -> vector<8x128xf32>
    %60 = arith.addf %58, %59 : vector<8x128xf32>
    %61 = math.tanh %60 : vector<8x128xf32>
    %62 = arith.index_cast %56 : i32 to index
    %c0_34 = arith.constant 0 : index
    %63 = vector.load %arg10[%62, %c0_34] : memref<64x128xf32, #tpu.memory_space<vmem>>, vector<8x128xf32>
    tpu.vector_store %arg10[%62, %c0_34], %61 {strides = array<i32>} : memref<64x128xf32, #tpu.memory_space<vmem>>, vector<8x128xf32>,
    %c6_i32 = arith.constant 6 : i32
    %c8_i32_35 = arith.constant 8 : i32
    %64 = arith.muli %c6_i32, %c8_i32_35 : i32
    %65 = tpu.assume_multiple %64, 8 : i32
    %66 = arith.index_cast %65 : i32 to index
    %c0_36 = arith.constant 0 : index
    %67 = vector.load %arg10[%66, %c0_36] : memref<64x128xf32, #tpu.memory_space<vmem>>, vector<8x128xf32>
    %cst_37 = arith.constant dense<0.000000e+00> : vector<8x128xf32>
    %68 = tpu.matmul %61, %7, %cst_37 {dimension_numbers = #tpu.dot_dimension_numbers<[1], [0], [0], [1], [0, 0, 1, 1], [], []>} : vector<8x128xf32>, vector<128x128xf32>, vector<8x128xf32> -> vector<8x128xf32>
    %69 = arith.addf %67, %68 : vector<8x128xf32>
    %70 = math.tanh %69 : vector<8x128xf32>
    %71 = arith.index_cast %65 : i32 to index
    %c0_38 = arith.constant 0 : index
    %72 = vector.load %arg10[%71, %c0_38] : memref<64x128xf32, #tpu.memory_space<vmem>>, vector<8x128xf32>
    tpu.vector_store %arg10[%71, %c0_38], %70 {strides = array<i32>} : memref<64x128xf32, #tpu.memory_space<vmem>>, vector<8x128xf32>,
    %c7_i32 = arith.constant 7 : i32
    %c8_i32_39 = arith.constant 8 : i32
    %73 = arith.muli %c7_i32, %c8_i32_39 : i32
    %74 = tpu.assume_multiple %73, 8 : i32
    %75 = arith.index_cast %74 : i32 to index
    %c0_40 = arith.constant 0 : index
    %76 = vector.load %arg10[%75, %c0_40] : memref<64x128xf32, #tpu.memory_space<vmem>>, vector<8x128xf32>
    %cst_41 = arith.constant dense<0.000000e+00> : vector<8x128xf32>
    %77 = tpu.matmul %70, %7, %cst_41 {dimension_numbers = #tpu.dot_dimension_numbers<[1], [0], [0], [1], [0, 0, 1, 1], [], []>} : vector<8x128xf32>, vector<128x128xf32>, vector<8x128xf32> -> vector<8x128xf32>
    %78 = arith.addf %76, %77 : vector<8x128xf32>
    %79 = math.tanh %78 : vector<8x128xf32>
    %80 = arith.index_cast %74 : i32 to index
    %c0_42 = arith.constant 0 : index
    %81 = vector.load %arg10[%80, %c0_42] : memref<64x128xf32, #tpu.memory_space<vmem>>, vector<8x128xf32>
    tpu.vector_store %arg10[%80, %c0_42], %79 {strides = array<i32>} : memref<64x128xf32, #tpu.memory_space<vmem>>, vector<8x128xf32>,
    %c8_i32_43 = arith.constant 8 : i32
    %c0_44 = arith.constant 0 : index
    %c0_45 = arith.constant 0 : index
    %82 = vector.load %arg10[%c0_44, %c0_45] : memref<64x128xf32, #tpu.memory_space<vmem>>, vector<64x128xf32>
    %c0_46 = arith.constant 0 : index
    %c0_47 = arith.constant 0 : index
    %83 = vector.load %arg4[%c0_46, %c0_47] : memref<128x512xf32, #tpu.memory_space<vmem>>, vector<128x512xf32>
    %cst_48 = arith.constant dense<0.000000e+00> : vector<64x512xf32>
    %84 = tpu.matmul %82, %83, %cst_48 {dimension_numbers = #tpu.dot_dimension_numbers<[1], [0], [0], [1], [0, 0, 1, 1], [], []>} : vector<64x128xf32>, vector<128x512xf32>, vector<64x512xf32> -> vector<64x512xf32>
    %c0_49 = arith.constant 0 : index
    %c0_50 = arith.constant 0 : index
    %85 = vector.load %arg6[%c0_49, %c0_50] : memref<1x512xf32, #tpu.memory_space<vmem>>, vector<1x512xf32>
    %86 = vector.broadcast %85 : vector<1x512xf32> to vector<64x512xf32>
    %87 = arith.addf %84, %86 : vector<64x512xf32>
    %c0_51 = arith.constant 0 : index
    %c0_52 = arith.constant 0 : index
    %88 = vector.load %arg11[%c0_51, %c0_52] : memref<64x512xf32, #tpu.memory_space<vmem>>, vector<64x512xf32>
    tpu.vector_store %arg11[%c0_51, %c0_52], %87 {strides = array<i32>} : memref<64x512xf32, #tpu.memory_space<vmem>>, vector<64x512xf32>,
    %c0_i32_53 = arith.constant 0 : i32
    %c8_i32_54 = arith.constant 8 : i32
    %89 = arith.muli %c0_i32_53, %c8_i32_54 : i32
    %90 = tpu.assume_multiple %89, 8 : i32
    %91 = arith.index_cast %90 : i32 to index
    %c0_55 = arith.constant 0 : index
    %92 = vector.load %arg11[%91, %c0_55] : memref<64x512xf32, #tpu.memory_space<vmem>>, vector<8x512xf32>
    %cst_56 = arith.constant dense<0.000000e+00> : vector<8x512xf32>
    %93 = tpu.matmul %9, %8, %cst_56 {dimension_numbers = #tpu.dot_dimension_numbers<[1], [0], [0], [1], [0, 0, 1, 1], [], []>} : vector<8x128xf32>, vector<128x512xf32>, vector<8x512xf32> -> vector<8x512xf32>
    %94 = arith.addf %92, %93 : vector<8x512xf32>
    %95 = vector.extract_strided_slice %94 {offsets = [0, 0], sizes = [8, 128], strides = [1, 1]} : vector<8x512xf32> to vector<8x128xf32>
    %cst_57 = arith.constant 5.000000e-01 : f32
    %96 = vector.broadcast %cst_57 : f32 to vector<8x128xf32>
    %97 = arith.mulf %96, %95 : vector<8x128xf32>
    %98 = math.tanh %97 : vector<8x128xf32>
    %cst_58 = arith.constant 5.000000e-01 : f32
    %99 = vector.broadcast %cst_58 : f32 to vector<8x128xf32>
    %100 = arith.mulf %99, %98 : vector<8x128xf32>
    %cst_59 = arith.constant 5.000000e-01 : f32
    %101 = vector.broadcast %cst_59 : f32 to vector<8x128xf32>
    %102 = arith.addf %100, %101 : vector<8x128xf32>
    %103 = vector.extract_strided_slice %94 {offsets = [0, 128], sizes = [8, 128], strides = [1, 1]} : vector<8x512xf32> to vector<8x128xf32>
    %cst_60 = arith.constant 5.000000e-01 : f32
    %104 = vector.broadcast %cst_60 : f32 to vector<8x128xf32>
    %105 = arith.mulf %104, %103 : vector<8x128xf32>
    %106 = math.tanh %105 : vector<8x128xf32>
    %cst_61 = arith.constant 5.000000e-01 : f32
    %107 = vector.broadcast %cst_61 : f32 to vector<8x128xf32>
    %108 = arith.mulf %107, %106 : vector<8x128xf32>
    %cst_62 = arith.constant 5.000000e-01 : f32
    %109 = vector.broadcast %cst_62 : f32 to vector<8x128xf32>
    %110 = arith.addf %108, %109 : vector<8x128xf32>
    %111 = vector.extract_strided_slice %94 {offsets = [0, 256], sizes = [8, 128], strides = [1, 1]} : vector<8x512xf32> to vector<8x128xf32>
    %112 = math.tanh %111 : vector<8x128xf32>
    %113 = vector.extract_strided_slice %94 {offsets = [0, 384], sizes = [8, 128], strides = [1, 1]} : vector<8x512xf32> to vector<8x128xf32>
    %cst_63 = arith.constant 5.000000e-01 : f32
    %114 = vector.broadcast %cst_63 : f32 to vector<8x128xf32>
    %115 = arith.mulf %114, %113 : vector<8x128xf32>
    %116 = math.tanh %115 : vector<8x128xf32>
    %cst_64 = arith.constant 5.000000e-01 : f32
    %117 = vector.broadcast %cst_64 : f32 to vector<8x128xf32>
    %118 = arith.mulf %117, %116 : vector<8x128xf32>
    %cst_65 = arith.constant 5.000000e-01 : f32
    %119 = vector.broadcast %cst_65 : f32 to vector<8x128xf32>
    %120 = arith.addf %118, %119 : vector<8x128xf32>
    %121 = arith.mulf %110, %9 : vector<8x128xf32>
    %122 = arith.mulf %102, %112 : vector<8x128xf32>
    %123 = arith.addf %121, %122 : vector<8x128xf32>
    %124 = math.tanh %123 : vector<8x128xf32>
    %125 = arith.mulf %120, %124 : vector<8x128xf32>
    %c1_i32_66 = arith.constant 1 : i32
    %c8_i32_67 = arith.constant 8 : i32
    %126 = arith.muli %c1_i32_66, %c8_i32_67 : i32
    %127 = tpu.assume_multiple %126, 8 : i32
    %128 = arith.index_cast %127 : i32 to index
    %c0_68 = arith.constant 0 : index
    %129 = vector.load %arg11[%128, %c0_68] : memref<64x512xf32, #tpu.memory_space<vmem>>, vector<8x512xf32>
    %cst_69 = arith.constant dense<0.000000e+00> : vector<8x512xf32>
    %130 = tpu.matmul %125, %8, %cst_69 {dimension_numbers = #tpu.dot_dimension_numbers<[1], [0], [0], [1], [0, 0, 1, 1], [], []>} : vector<8x128xf32>, vector<128x512xf32>, vector<8x512xf32> -> vector<8x512xf32>
    %131 = arith.addf %129, %130 : vector<8x512xf32>
    %132 = vector.extract_strided_slice %131 {offsets = [0, 0], sizes = [8, 128], strides = [1, 1]} : vector<8x512xf32> to vector<8x128xf32>
    %cst_70 = arith.constant 5.000000e-01 : f32
    %133 = vector.broadcast %cst_70 : f32 to vector<8x128xf32>
    %134 = arith.mulf %133, %132 : vector<8x128xf32>
    %135 = math.tanh %134 : vector<8x128xf32>
    %cst_71 = arith.constant 5.000000e-01 : f32
    %136 = vector.broadcast %cst_71 : f32 to vector<8x128xf32>
    %137 = arith.mulf %136, %135 : vector<8x128xf32>
    %cst_72 = arith.constant 5.000000e-01 : f32
    %138 = vector.broadcast %cst_72 : f32 to vector<8x128xf32>
    %139 = arith.addf %137, %138 : vector<8x128xf32>
    %140 = vector.extract_strided_slice %131 {offsets = [0, 128], sizes = [8, 128], strides = [1, 1]} : vector<8x512xf32> to vector<8x128xf32>
    %cst_73 = arith.constant 5.000000e-01 : f32
    %141 = vector.broadcast %cst_73 : f32 to vector<8x128xf32>
    %142 = arith.mulf %141, %140 : vector<8x128xf32>
    %143 = math.tanh %142 : vector<8x128xf32>
    %cst_74 = arith.constant 5.000000e-01 : f32
    %144 = vector.broadcast %cst_74 : f32 to vector<8x128xf32>
    %145 = arith.mulf %144, %143 : vector<8x128xf32>
    %cst_75 = arith.constant 5.000000e-01 : f32
    %146 = vector.broadcast %cst_75 : f32 to vector<8x128xf32>
    %147 = arith.addf %145, %146 : vector<8x128xf32>
    %148 = vector.extract_strided_slice %131 {offsets = [0, 256], sizes = [8, 128], strides = [1, 1]} : vector<8x512xf32> to vector<8x128xf32>
    %149 = math.tanh %148 : vector<8x128xf32>
    %150 = vector.extract_strided_slice %131 {offsets = [0, 384], sizes = [8, 128], strides = [1, 1]} : vector<8x512xf32> to vector<8x128xf32>
    %cst_76 = arith.constant 5.000000e-01 : f32
    %151 = vector.broadcast %cst_76 : f32 to vector<8x128xf32>
    %152 = arith.mulf %151, %150 : vector<8x128xf32>
    %153 = math.tanh %152 : vector<8x128xf32>
    %cst_77 = arith.constant 5.000000e-01 : f32
    %154 = vector.broadcast %cst_77 : f32 to vector<8x128xf32>
    %155 = arith.mulf %154, %153 : vector<8x128xf32>
    %cst_78 = arith.constant 5.000000e-01 : f32
    %156 = vector.broadcast %cst_78 : f32 to vector<8x128xf32>
    %157 = arith.addf %155, %156 : vector<8x128xf32>
    %158 = arith.mulf %147, %123 : vector<8x128xf32>
    %159 = arith.mulf %139, %149 : vector<8x128xf32>
    %160 = arith.addf %158, %159 : vector<8x128xf32>
    %161 = math.tanh %160 : vector<8x128xf32>
    %162 = arith.mulf %157, %161 : vector<8x128xf32>
    %c2_i32_79 = arith.constant 2 : i32
    %c8_i32_80 = arith.constant 8 : i32
    %163 = arith.muli %c2_i32_79, %c8_i32_80 : i32
    %164 = tpu.assume_multiple %163, 8 : i32
    %165 = arith.index_cast %164 : i32 to index
    %c0_81 = arith.constant 0 : index
    %166 = vector.load %arg11[%165, %c0_81] : memref<64x512xf32, #tpu.memory_space<vmem>>, vector<8x512xf32>
    %cst_82 = arith.constant dense<0.000000e+00> : vector<8x512xf32>
    %167 = tpu.matmul %162, %8, %cst_82 {dimension_numbers = #tpu.dot_dimension_numbers<[1], [0], [0], [1], [0, 0, 1, 1], [], []>} : vector<8x128xf32>, vector<128x512xf32>, vector<8x512xf32> -> vector<8x512xf32>
    %168 = arith.addf %166, %167 : vector<8x512xf32>
    %169 = vector.extract_strided_slice %168 {offsets = [0, 0], sizes = [8, 128], strides = [1, 1]} : vector<8x512xf32> to vector<8x128xf32>
    %cst_83 = arith.constant 5.000000e-01 : f32
    %170 = vector.broadcast %cst_83 : f32 to vector<8x128xf32>
    %171 = arith.mulf %170, %169 : vector<8x128xf32>
    %172 = math.tanh %171 : vector<8x128xf32>
    %cst_84 = arith.constant 5.000000e-01 : f32
    %173 = vector.broadcast %cst_84 : f32 to vector<8x128xf32>
    %174 = arith.mulf %173, %172 : vector<8x128xf32>
    %cst_85 = arith.constant 5.000000e-01 : f32
    %175 = vector.broadcast %cst_85 : f32 to vector<8x128xf32>
    %176 = arith.addf %174, %175 : vector<8x128xf32>
    %177 = vector.extract_strided_slice %168 {offsets = [0, 128], sizes = [8, 128], strides = [1, 1]} : vector<8x512xf32> to vector<8x128xf32>
    %cst_86 = arith.constant 5.000000e-01 : f32
    %178 = vector.broadcast %cst_86 : f32 to vector<8x128xf32>
    %179 = arith.mulf %178, %177 : vector<8x128xf32>
    %180 = math.tanh %179 : vector<8x128xf32>
    %cst_87 = arith.constant 5.000000e-01 : f32
    %181 = vector.broadcast %cst_87 : f32 to vector<8x128xf32>
    %182 = arith.mulf %181, %180 : vector<8x128xf32>
    %cst_88 = arith.constant 5.000000e-01 : f32
    %183 = vector.broadcast %cst_88 : f32 to vector<8x128xf32>
    %184 = arith.addf %182, %183 : vector<8x128xf32>
    %185 = vector.extract_strided_slice %168 {offsets = [0, 256], sizes = [8, 128], strides = [1, 1]} : vector<8x512xf32> to vector<8x128xf32>
    %186 = math.tanh %185 : vector<8x128xf32>
    %187 = vector.extract_strided_slice %168 {offsets = [0, 384], sizes = [8, 128], strides = [1, 1]} : vector<8x512xf32> to vector<8x128xf32>
    %cst_89 = arith.constant 5.000000e-01 : f32
    %188 = vector.broadcast %cst_89 : f32 to vector<8x128xf32>
    %189 = arith.mulf %188, %187 : vector<8x128xf32>
    %190 = math.tanh %189 : vector<8x128xf32>
    %cst_90 = arith.constant 5.000000e-01 : f32
    %191 = vector.broadcast %cst_90 : f32 to vector<8x128xf32>
    %192 = arith.mulf %191, %190 : vector<8x128xf32>
    %cst_91 = arith.constant 5.000000e-01 : f32
    %193 = vector.broadcast %cst_91 : f32 to vector<8x128xf32>
    %194 = arith.addf %192, %193 : vector<8x128xf32>
    %195 = arith.mulf %184, %160 : vector<8x128xf32>
    %196 = arith.mulf %176, %186 : vector<8x128xf32>
    %197 = arith.addf %195, %196 : vector<8x128xf32>
    %198 = math.tanh %197 : vector<8x128xf32>
    %199 = arith.mulf %194, %198 : vector<8x128xf32>
    %c3_i32_92 = arith.constant 3 : i32
    %c8_i32_93 = arith.constant 8 : i32
    %200 = arith.muli %c3_i32_92, %c8_i32_93 : i32
    %201 = tpu.assume_multiple %200, 8 : i32
    %202 = arith.index_cast %201 : i32 to index
    %c0_94 = arith.constant 0 : index
    %203 = vector.load %arg11[%202, %c0_94] : memref<64x512xf32, #tpu.memory_space<vmem>>, vector<8x512xf32>
    %cst_95 = arith.constant dense<0.000000e+00> : vector<8x512xf32>
    %204 = tpu.matmul %199, %8, %cst_95 {dimension_numbers = #tpu.dot_dimension_numbers<[1], [0], [0], [1], [0, 0, 1, 1], [], []>} : vector<8x128xf32>, vector<128x512xf32>, vector<8x512xf32> -> vector<8x512xf32>
    %205 = arith.addf %203, %204 : vector<8x512xf32>
    %206 = vector.extract_strided_slice %205 {offsets = [0, 0], sizes = [8, 128], strides = [1, 1]} : vector<8x512xf32> to vector<8x128xf32>
    %cst_96 = arith.constant 5.000000e-01 : f32
    %207 = vector.broadcast %cst_96 : f32 to vector<8x128xf32>
    %208 = arith.mulf %207, %206 : vector<8x128xf32>
    %209 = math.tanh %208 : vector<8x128xf32>
    %cst_97 = arith.constant 5.000000e-01 : f32
    %210 = vector.broadcast %cst_97 : f32 to vector<8x128xf32>
    %211 = arith.mulf %210, %209 : vector<8x128xf32>
    %cst_98 = arith.constant 5.000000e-01 : f32
    %212 = vector.broadcast %cst_98 : f32 to vector<8x128xf32>
    %213 = arith.addf %211, %212 : vector<8x128xf32>
    %214 = vector.extract_strided_slice %205 {offsets = [0, 128], sizes = [8, 128], strides = [1, 1]} : vector<8x512xf32> to vector<8x128xf32>
    %cst_99 = arith.constant 5.000000e-01 : f32
    %215 = vector.broadcast %cst_99 : f32 to vector<8x128xf32>
    %216 = arith.mulf %215, %214 : vector<8x128xf32>
    %217 = math.tanh %216 : vector<8x128xf32>
    %cst_100 = arith.constant 5.000000e-01 : f32
    %218 = vector.broadcast %cst_100 : f32 to vector<8x128xf32>
    %219 = arith.mulf %218, %217 : vector<8x128xf32>
    %cst_101 = arith.constant 5.000000e-01 : f32
    %220 = vector.broadcast %cst_101 : f32 to vector<8x128xf32>
    %221 = arith.addf %219, %220 : vector<8x128xf32>
    %222 = vector.extract_strided_slice %205 {offsets = [0, 256], sizes = [8, 128], strides = [1, 1]} : vector<8x512xf32> to vector<8x128xf32>
    %223 = math.tanh %222 : vector<8x128xf32>
    %224 = vector.extract_strided_slice %205 {offsets = [0, 384], sizes = [8, 128], strides = [1, 1]} : vector<8x512xf32> to vector<8x128xf32>
    %cst_102 = arith.constant 5.000000e-01 : f32
    %225 = vector.broadcast %cst_102 : f32 to vector<8x128xf32>
    %226 = arith.mulf %225, %224 : vector<8x128xf32>
    %227 = math.tanh %226 : vector<8x128xf32>
    %cst_103 = arith.constant 5.000000e-01 : f32
    %228 = vector.broadcast %cst_103 : f32 to vector<8x128xf32>
    %229 = arith.mulf %228, %227 : vector<8x128xf32>
    %cst_104 = arith.constant 5.000000e-01 : f32
    %230 = vector.broadcast %cst_104 : f32 to vector<8x128xf32>
    %231 = arith.addf %229, %230 : vector<8x128xf32>
    %232 = arith.mulf %221, %197 : vector<8x128xf32>
    %233 = arith.mulf %213, %223 : vector<8x128xf32>
    %234 = arith.addf %232, %233 : vector<8x128xf32>
    %235 = math.tanh %234 : vector<8x128xf32>
    %236 = arith.mulf %231, %235 : vector<8x128xf32>
    %c4_i32_105 = arith.constant 4 : i32
    %c8_i32_106 = arith.constant 8 : i32
    %237 = arith.muli %c4_i32_105, %c8_i32_106 : i32
    %238 = tpu.assume_multiple %237, 8 : i32
    %239 = arith.index_cast %238 : i32 to index
    %c0_107 = arith.constant 0 : index
    %240 = vector.load %arg11[%239, %c0_107] : memref<64x512xf32, #tpu.memory_space<vmem>>, vector<8x512xf32>
    %cst_108 = arith.constant dense<0.000000e+00> : vector<8x512xf32>
    %241 = tpu.matmul %236, %8, %cst_108 {dimension_numbers = #tpu.dot_dimension_numbers<[1], [0], [0], [1], [0, 0, 1, 1], [], []>} : vector<8x128xf32>, vector<128x512xf32>, vector<8x512xf32> -> vector<8x512xf32>
    %242 = arith.addf %240, %241 : vector<8x512xf32>
    %243 = vector.extract_strided_slice %242 {offsets = [0, 0], sizes = [8, 128], strides = [1, 1]} : vector<8x512xf32> to vector<8x128xf32>
    %cst_109 = arith.constant 5.000000e-01 : f32
    %244 = vector.broadcast %cst_109 : f32 to vector<8x128xf32>
    %245 = arith.mulf %244, %243 : vector<8x128xf32>
    %246 = math.tanh %245 : vector<8x128xf32>
    %cst_110 = arith.constant 5.000000e-01 : f32
    %247 = vector.broadcast %cst_110 : f32 to vector<8x128xf32>
    %248 = arith.mulf %247, %246 : vector<8x128xf32>
    %cst_111 = arith.constant 5.000000e-01 : f32
    %249 = vector.broadcast %cst_111 : f32 to vector<8x128xf32>
    %250 = arith.addf %248, %249 : vector<8x128xf32>
    %251 = vector.extract_strided_slice %242 {offsets = [0, 128], sizes = [8, 128], strides = [1, 1]} : vector<8x512xf32> to vector<8x128xf32>
    %cst_112 = arith.constant 5.000000e-01 : f32
    %252 = vector.broadcast %cst_112 : f32 to vector<8x128xf32>
    %253 = arith.mulf %252, %251 : vector<8x128xf32>
    %254 = math.tanh %253 : vector<8x128xf32>
    %cst_113 = arith.constant 5.000000e-01 : f32
    %255 = vector.broadcast %cst_113 : f32 to vector<8x128xf32>
    %256 = arith.mulf %255, %254 : vector<8x128xf32>
    %cst_114 = arith.constant 5.000000e-01 : f32
    %257 = vector.broadcast %cst_114 : f32 to vector<8x128xf32>
    %258 = arith.addf %256, %257 : vector<8x128xf32>
    %259 = vector.extract_strided_slice %242 {offsets = [0, 256], sizes = [8, 128], strides = [1, 1]} : vector<8x512xf32> to vector<8x128xf32>
    %260 = math.tanh %259 : vector<8x128xf32>
    %261 = vector.extract_strided_slice %242 {offsets = [0, 384], sizes = [8, 128], strides = [1, 1]} : vector<8x512xf32> to vector<8x128xf32>
    %cst_115 = arith.constant 5.000000e-01 : f32
    %262 = vector.broadcast %cst_115 : f32 to vector<8x128xf32>
    %263 = arith.mulf %262, %261 : vector<8x128xf32>
    %264 = math.tanh %263 : vector<8x128xf32>
    %cst_116 = arith.constant 5.000000e-01 : f32
    %265 = vector.broadcast %cst_116 : f32 to vector<8x128xf32>
    %266 = arith.mulf %265, %264 : vector<8x128xf32>
    %cst_117 = arith.constant 5.000000e-01 : f32
    %267 = vector.broadcast %cst_117 : f32 to vector<8x128xf32>
    %268 = arith.addf %266, %267 : vector<8x128xf32>
    %269 = arith.mulf %258, %234 : vector<8x128xf32>
    %270 = arith.mulf %250, %260 : vector<8x128xf32>
    %271 = arith.addf %269, %270 : vector<8x128xf32>
    %272 = math.tanh %271 : vector<8x128xf32>
    %273 = arith.mulf %268, %272 : vector<8x128xf32>
    %c5_i32_118 = arith.constant 5 : i32
    %c8_i32_119 = arith.constant 8 : i32
    %274 = arith.muli %c5_i32_118, %c8_i32_119 : i32
    %275 = tpu.assume_multiple %274, 8 : i32
    %276 = arith.index_cast %275 : i32 to index
    %c0_120 = arith.constant 0 : index
    %277 = vector.load %arg11[%276, %c0_120] : memref<64x512xf32, #tpu.memory_space<vmem>>, vector<8x512xf32>
    %cst_121 = arith.constant dense<0.000000e+00> : vector<8x512xf32>
    %278 = tpu.matmul %273, %8, %cst_121 {dimension_numbers = #tpu.dot_dimension_numbers<[1], [0], [0], [1], [0, 0, 1, 1], [], []>} : vector<8x128xf32>, vector<128x512xf32>, vector<8x512xf32> -> vector<8x512xf32>
    %279 = arith.addf %277, %278 : vector<8x512xf32>
    %280 = vector.extract_strided_slice %279 {offsets = [0, 0], sizes = [8, 128], strides = [1, 1]} : vector<8x512xf32> to vector<8x128xf32>
    %cst_122 = arith.constant 5.000000e-01 : f32
    %281 = vector.broadcast %cst_122 : f32 to vector<8x128xf32>
    %282 = arith.mulf %281, %280 : vector<8x128xf32>
    %283 = math.tanh %282 : vector<8x128xf32>
    %cst_123 = arith.constant 5.000000e-01 : f32
    %284 = vector.broadcast %cst_123 : f32 to vector<8x128xf32>
    %285 = arith.mulf %284, %283 : vector<8x128xf32>
    %cst_124 = arith.constant 5.000000e-01 : f32
    %286 = vector.broadcast %cst_124 : f32 to vector<8x128xf32>
    %287 = arith.addf %285, %286 : vector<8x128xf32>
    %288 = vector.extract_strided_slice %279 {offsets = [0, 128], sizes = [8, 128], strides = [1, 1]} : vector<8x512xf32> to vector<8x128xf32>
    %cst_125 = arith.constant 5.000000e-01 : f32
    %289 = vector.broadcast %cst_125 : f32 to vector<8x128xf32>
    %290 = arith.mulf %289, %288 : vector<8x128xf32>
    %291 = math.tanh %290 : vector<8x128xf32>
    %cst_126 = arith.constant 5.000000e-01 : f32
    %292 = vector.broadcast %cst_126 : f32 to vector<8x128xf32>
    %293 = arith.mulf %292, %291 : vector<8x128xf32>
    %cst_127 = arith.constant 5.000000e-01 : f32
    %294 = vector.broadcast %cst_127 : f32 to vector<8x128xf32>
    %295 = arith.addf %293, %294 : vector<8x128xf32>
    %296 = vector.extract_strided_slice %279 {offsets = [0, 256], sizes = [8, 128], strides = [1, 1]} : vector<8x512xf32> to vector<8x128xf32>
    %297 = math.tanh %296 : vector<8x128xf32>
    %298 = vector.extract_strided_slice %279 {offsets = [0, 384], sizes = [8, 128], strides = [1, 1]} : vector<8x512xf32> to vector<8x128xf32>
    %cst_128 = arith.constant 5.000000e-01 : f32
    %299 = vector.broadcast %cst_128 : f32 to vector<8x128xf32>
    %300 = arith.mulf %299, %298 : vector<8x128xf32>
    %301 = math.tanh %300 : vector<8x128xf32>
    %cst_129 = arith.constant 5.000000e-01 : f32
    %302 = vector.broadcast %cst_129 : f32 to vector<8x128xf32>
    %303 = arith.mulf %302, %301 : vector<8x128xf32>
    %cst_130 = arith.constant 5.000000e-01 : f32
    %304 = vector.broadcast %cst_130 : f32 to vector<8x128xf32>
    %305 = arith.addf %303, %304 : vector<8x128xf32>
    %306 = arith.mulf %295, %271 : vector<8x128xf32>
    %307 = arith.mulf %287, %297 : vector<8x128xf32>
    %308 = arith.addf %306, %307 : vector<8x128xf32>
    %309 = math.tanh %308 : vector<8x128xf32>
    %310 = arith.mulf %305, %309 : vector<8x128xf32>
    %c6_i32_131 = arith.constant 6 : i32
    %c8_i32_132 = arith.constant 8 : i32
    %311 = arith.muli %c6_i32_131, %c8_i32_132 : i32
    %312 = tpu.assume_multiple %311, 8 : i32
    %313 = arith.index_cast %312 : i32 to index
    %c0_133 = arith.constant 0 : index
    %314 = vector.load %arg11[%313, %c0_133] : memref<64x512xf32, #tpu.memory_space<vmem>>, vector<8x512xf32>
    %cst_134 = arith.constant dense<0.000000e+00> : vector<8x512xf32>
    %315 = tpu.matmul %310, %8, %cst_134 {dimension_numbers = #tpu.dot_dimension_numbers<[1], [0], [0], [1], [0, 0, 1, 1], [], []>} : vector<8x128xf32>, vector<128x512xf32>, vector<8x512xf32> -> vector<8x512xf32>
    %316 = arith.addf %314, %315 : vector<8x512xf32>
    %317 = vector.extract_strided_slice %316 {offsets = [0, 0], sizes = [8, 128], strides = [1, 1]} : vector<8x512xf32> to vector<8x128xf32>
    %cst_135 = arith.constant 5.000000e-01 : f32
    %318 = vector.broadcast %cst_135 : f32 to vector<8x128xf32>
    %319 = arith.mulf %318, %317 : vector<8x128xf32>
    %320 = math.tanh %319 : vector<8x128xf32>
    %cst_136 = arith.constant 5.000000e-01 : f32
    %321 = vector.broadcast %cst_136 : f32 to vector<8x128xf32>
    %322 = arith.mulf %321, %320 : vector<8x128xf32>
    %cst_137 = arith.constant 5.000000e-01 : f32
    %323 = vector.broadcast %cst_137 : f32 to vector<8x128xf32>
    %324 = arith.addf %322, %323 : vector<8x128xf32>
    %325 = vector.extract_strided_slice %316 {offsets = [0, 128], sizes = [8, 128], strides = [1, 1]} : vector<8x512xf32> to vector<8x128xf32>
    %cst_138 = arith.constant 5.000000e-01 : f32
    %326 = vector.broadcast %cst_138 : f32 to vector<8x128xf32>
    %327 = arith.mulf %326, %325 : vector<8x128xf32>
    %328 = math.tanh %327 : vector<8x128xf32>
    %cst_139 = arith.constant 5.000000e-01 : f32
    %329 = vector.broadcast %cst_139 : f32 to vector<8x128xf32>
    %330 = arith.mulf %329, %328 : vector<8x128xf32>
    %cst_140 = arith.constant 5.000000e-01 : f32
    %331 = vector.broadcast %cst_140 : f32 to vector<8x128xf32>
    %332 = arith.addf %330, %331 : vector<8x128xf32>
    %333 = vector.extract_strided_slice %316 {offsets = [0, 256], sizes = [8, 128], strides = [1, 1]} : vector<8x512xf32> to vector<8x128xf32>
    %334 = math.tanh %333 : vector<8x128xf32>
    %335 = vector.extract_strided_slice %316 {offsets = [0, 384], sizes = [8, 128], strides = [1, 1]} : vector<8x512xf32> to vector<8x128xf32>
    %cst_141 = arith.constant 5.000000e-01 : f32
    %336 = vector.broadcast %cst_141 : f32 to vector<8x128xf32>
    %337 = arith.mulf %336, %335 : vector<8x128xf32>
    %338 = math.tanh %337 : vector<8x128xf32>
    %cst_142 = arith.constant 5.000000e-01 : f32
    %339 = vector.broadcast %cst_142 : f32 to vector<8x128xf32>
    %340 = arith.mulf %339, %338 : vector<8x128xf32>
    %cst_143 = arith.constant 5.000000e-01 : f32
    %341 = vector.broadcast %cst_143 : f32 to vector<8x128xf32>
    %342 = arith.addf %340, %341 : vector<8x128xf32>
    %343 = arith.mulf %332, %308 : vector<8x128xf32>
    %344 = arith.mulf %324, %334 : vector<8x128xf32>
    %345 = arith.addf %343, %344 : vector<8x128xf32>
    %346 = math.tanh %345 : vector<8x128xf32>
    %347 = arith.mulf %342, %346 : vector<8x128xf32>
    %c7_i32_144 = arith.constant 7 : i32
    %c8_i32_145 = arith.constant 8 : i32
    %348 = arith.muli %c7_i32_144, %c8_i32_145 : i32
    %349 = tpu.assume_multiple %348, 8 : i32
    %350 = arith.index_cast %349 : i32 to index
    %c0_146 = arith.constant 0 : index
    %351 = vector.load %arg11[%350, %c0_146] : memref<64x512xf32, #tpu.memory_space<vmem>>, vector<8x512xf32>
    %cst_147 = arith.constant dense<0.000000e+00> : vector<8x512xf32>
    %352 = tpu.matmul %347, %8, %cst_147 {dimension_numbers = #tpu.dot_dimension_numbers<[1], [0], [0], [1], [0, 0, 1, 1], [], []>} : vector<8x128xf32>, vector<128x512xf32>, vector<8x512xf32> -> vector<8x512xf32>
    %353 = arith.addf %351, %352 : vector<8x512xf32>
    %354 = vector.extract_strided_slice %353 {offsets = [0, 0], sizes = [8, 128], strides = [1, 1]} : vector<8x512xf32> to vector<8x128xf32>
    %cst_148 = arith.constant 5.000000e-01 : f32
    %355 = vector.broadcast %cst_148 : f32 to vector<8x128xf32>
    %356 = arith.mulf %355, %354 : vector<8x128xf32>
    %357 = math.tanh %356 : vector<8x128xf32>
    %cst_149 = arith.constant 5.000000e-01 : f32
    %358 = vector.broadcast %cst_149 : f32 to vector<8x128xf32>
    %359 = arith.mulf %358, %357 : vector<8x128xf32>
    %cst_150 = arith.constant 5.000000e-01 : f32
    %360 = vector.broadcast %cst_150 : f32 to vector<8x128xf32>
    %361 = arith.addf %359, %360 : vector<8x128xf32>
    %362 = vector.extract_strided_slice %353 {offsets = [0, 128], sizes = [8, 128], strides = [1, 1]} : vector<8x512xf32> to vector<8x128xf32>
    %cst_151 = arith.constant 5.000000e-01 : f32
    %363 = vector.broadcast %cst_151 : f32 to vector<8x128xf32>
    %364 = arith.mulf %363, %362 : vector<8x128xf32>
    %365 = math.tanh %364 : vector<8x128xf32>
    %cst_152 = arith.constant 5.000000e-01 : f32
    %366 = vector.broadcast %cst_152 : f32 to vector<8x128xf32>
    %367 = arith.mulf %366, %365 : vector<8x128xf32>
    %cst_153 = arith.constant 5.000000e-01 : f32
    %368 = vector.broadcast %cst_153 : f32 to vector<8x128xf32>
    %369 = arith.addf %367, %368 : vector<8x128xf32>
    %370 = vector.extract_strided_slice %353 {offsets = [0, 256], sizes = [8, 128], strides = [1, 1]} : vector<8x512xf32> to vector<8x128xf32>
    %371 = math.tanh %370 : vector<8x128xf32>
    %372 = vector.extract_strided_slice %353 {offsets = [0, 384], sizes = [8, 128], strides = [1, 1]} : vector<8x512xf32> to vector<8x128xf32>
    %cst_154 = arith.constant 5.000000e-01 : f32
    %373 = vector.broadcast %cst_154 : f32 to vector<8x128xf32>
    %374 = arith.mulf %373, %372 : vector<8x128xf32>
    %375 = math.tanh %374 : vector<8x128xf32>
    %cst_155 = arith.constant 5.000000e-01 : f32
    %376 = vector.broadcast %cst_155 : f32 to vector<8x128xf32>
    %377 = arith.mulf %376, %375 : vector<8x128xf32>
    %cst_156 = arith.constant 5.000000e-01 : f32
    %378 = vector.broadcast %cst_156 : f32 to vector<8x128xf32>
    %379 = arith.addf %377, %378 : vector<8x128xf32>
    %380 = arith.mulf %369, %345 : vector<8x128xf32>
    %381 = arith.mulf %361, %371 : vector<8x128xf32>
    %382 = arith.addf %380, %381 : vector<8x128xf32>
    %383 = math.tanh %382 : vector<8x128xf32>
    %384 = arith.mulf %379, %383 : vector<8x128xf32>
    %c8_i32_157 = arith.constant 8 : i32
    %c0_158 = arith.constant 0 : index
    %c0_159 = arith.constant 0 : index
    %385 = vector.load %arg7[%c0_158, %c0_159] : memref<128x128xf32, #tpu.memory_space<vmem>>, vector<128x128xf32>
    %cst_160 = arith.constant dense<0.000000e+00> : vector<8x128xf32>
    %386 = tpu.matmul %384, %385, %cst_160 {dimension_numbers = #tpu.dot_dimension_numbers<[1], [0], [0], [1], [0, 0, 1, 1], [], []>} : vector<8x128xf32>, vector<128x128xf32>, vector<8x128xf32> -> vector<8x128xf32>
    %c0_161 = arith.constant 0 : index
    %c0_162 = arith.constant 0 : index
    %387 = vector.load %arg8[%c0_161, %c0_162] : memref<1x128xf32, #tpu.memory_space<vmem>>, vector<1x128xf32>
    %388 = vector.broadcast %387 : vector<1x128xf32> to vector<8x128xf32>
    %389 = arith.addf %386, %388 : vector<8x128xf32>
    %c0_163 = arith.constant 0 : index
    %c0_164 = arith.constant 0 : index
    %390 = vector.load %arg9[%c0_163, %c0_164] : memref<8x128xf32, #tpu.memory_space<vmem>>, vector<8x128xf32>
    tpu.vector_store %arg9[%c0_163, %c0_164], %389 {strides = array<i32>} : memref<8x128xf32, #tpu.memory_space<vmem>>, vector<8x128xf32>,
    return
  }
}

</mosaic_0001>

<llo_original>
// kernel: tpu_custom_call.1
$region0: #{tpu_custom_call.1}
  #allocation0 [shape = 'u32[]', space=smem, size = 0x4, offset = 0x4, fixed_abs, tag = 'smem constant byte address 0x4 - core index']
  #allocation1 [shape = 'u32[72,128]{1,0:T(1,128)}', space=vmem, size = 0x9000, scoped, tag = 'internal scratch']
  #allocation2 [shape = 'f32[64,128]{1,0:T(8,128)}', space=vmem, size = 0x8000, scoped, tag = 'scratch operand']
  #allocation3 [shape = 'f32[64,512]{1,0:T(8,128)}', space=vmem, size = 0x20000, scoped, tag = 'scratch operand']
  %s0 = inlined_call_operand.vmem [shape: f32[64,4], index: 0, kind: input, shape index: {}]
  %s1 = inlined_call_operand.vmem [shape: f32[4,128], index: 1, kind: input, shape index: {}]
  %s2 = inlined_call_operand.vmem [shape: f32[1,128], index: 2, kind: input, shape index: {}]
  %s3 = inlined_call_operand.hbm [shape: f32[128,128], index: 3, kind: input, shape index: {}]
  %s4 = inlined_call_operand.hbm [shape: f32[128,512], index: 4, kind: input, shape index: {}]
  %s5 = inlined_call_operand.hbm [shape: f32[128,512], index: 5, kind: input, shape index: {}]
  %s6 = inlined_call_operand.vmem [shape: f32[1,512], index: 6, kind: input, shape index: {}]
  %s7 = inlined_call_operand.hbm [shape: f32[128,128], index: 7, kind: input, shape index: {}]
  %s8 = inlined_call_operand.vmem [shape: f32[1,128], index: 8, kind: input, shape index: {}]
  %s9 = inlined_call_operand.hbm [shape: f32[8,128], index: 9, kind: output, shape index: {}]
  %s10 = sld [smem:[#allocation0]]
  $region62: #{tpu_custom_call.1} parent=0
    _
  %s12 = ssub.s32 1, %s10
  %s13 = scalar_select 0, %s12, %s10
  $region1: #{tpu_custom_call.1} parent=0
    #allocation4 [shape = 'u8[65536]{0}', space=vmem, size = 0x10000, scoped, tag = 'input window, operand 3, single buffered']
    #allocation5 [shape = 's32[1]{0}', space=sflag, size = 0x4, scoped, tag = 'scoped memory for tpu_custom_call.1']
    #allocation6 [shape = 's32[1]{0}', space=sflag, size = 0x4, scoped, tag = 'scoped memory for tpu_custom_call.1']
    #allocation7 [shape = 'u8[262144]{0}', space=vmem, size = 0x40000, scoped, tag = 'input window, operand 4, single buffered']
    #allocation8 [shape = 's32[1]{0}', space=sflag, size = 0x4, scoped, tag = 'scoped memory for tpu_custom_call.1']
    #allocation9 [shape = 'u8[262144]{0}', space=vmem, size = 0x40000, scoped, tag = 'input window, operand 5, single buffered']
    #allocation10 [shape = 'u8[65536]{0}', space=vmem, size = 0x10000, scoped, tag = 'input window, operand 7, single buffered']
    #allocation11 [shape = 's32[1]{0}', space=sflag, size = 0x4, scoped, tag = 'scoped memory for tpu_custom_call.1']
    #allocation12 [shape = 'u8[4096]{0}', space=vmem, size = 0x1000, scoped, tag = 'output window, operand 0, single buffered']
    %14 = vsyncpa [#allocation5], 0
    %15 = vsyncpa [#allocation8], 0
    %16 = vsyncpa [#allocation11], 0
    %17 = vsyncpa [#allocation6], 0
    // Predicated region
    $region2: #{tpu_custom_call.1} parent=1 // pred_check
      _
    $region3: #{tpu_custom_call.1} parent=1 // pred_check_branch
      %19 = sbr.rel (0) target = $region5
    $region4: #{tpu_custom_call.1} parent=1 // pred_region
      _
    $region5: #{tpu_custom_call.1} parent=1 // pred_fallthru
      _
    // Predicated region
    $region6: #{tpu_custom_call.1} parent=1 // pred_check
      _
    $region7: #{tpu_custom_call.1} parent=1 // pred_check_branch
      %21 = sbr.rel (0) target = $region9
    $region8: #{tpu_custom_call.1} parent=1 // pred_region
      _
    $region9: #{tpu_custom_call.1} parent=1 // pred_fallthru
      _
    // Predicated region
    $region10: #{tpu_custom_call.1} parent=1 // pred_check
      _
    $region11: #{tpu_custom_call.1} parent=1 // pred_check_branch
      %23 = sbr.rel (0) target = $region13
    $region12: #{tpu_custom_call.1} parent=1 // pred_region
      _
    $region13: #{tpu_custom_call.1} parent=1 // pred_fallthru
      _
    // Predicated region
    $region14: #{tpu_custom_call.1} parent=1 // pred_check
      _
    $region15: #{tpu_custom_call.1} parent=1 // pred_check_branch
      %25 = sbr.rel (0) target = $region17
    $region16: #{tpu_custom_call.1} parent=1 // pred_region
      %27 = vsyncadd [#allocation5], 0
      %s28 = sshll.u32 %s3, 4
      %s29 = int_to_ptr.hbm [resolvable:$true] %s28
      %s30 = sshll.u32 [#allocation4], 4
      %s31 = int_to_ptr.vmem [resolvable:$true] %s30
      %36 = dma.hbm_to_vmem [thread:$0]  %s29, 2048, %s31, [#allocation5], 128, 128, 8
    $region17: #{tpu_custom_call.1} parent=1 // pred_fallthru
      _
    // Predicated region
    $region18: #{tpu_custom_call.1} parent=1 // pred_check
      _
    $region19: #{tpu_custom_call.1} parent=1 // pred_check_branch
      %38 = sbr.rel (0) target = $region21
    $region20: #{tpu_custom_call.1} parent=1 // pred_region
      %40 = vsyncadd [#allocation8], 0
      %s41 = sshll.u32 %s4, 4
      %s42 = int_to_ptr.hbm [resolvable:$true] %s41
      %s43 = sshll.u32 [#allocation7], 4
      %s44 = int_to_ptr.vmem [resolvable:$true] %s43
      %49 = dma.hbm_to_vmem [thread:$0]  %s42, 8192, %s44, [#allocation8], 512, 512, 32
    $region21: #{tpu_custom_call.1} parent=1 // pred_fallthru
      _
    // Predicated region
    $region22: #{tpu_custom_call.1} parent=1 // pred_check
      _
    $region23: #{tpu_custom_call.1} parent=1 // pred_check_branch
      %51 = sbr.rel (0) target = $region25
    $region24: #{tpu_custom_call.1} parent=1 // pred_region
      %53 = vsyncadd [#allocation8], 0
      %s54 = sshll.u32 %s5, 4
      %s55 = int_to_ptr.hbm [resolvable:$true] %s54
      %s56 = sshll.u32 [#allocation9], 4
      %s57 = int_to_ptr.vmem [resolvable:$true] %s56
      %62 = dma.hbm_to_vmem [thread:$0]  %s55, 8192, %s57, [#allocation8], 512, 512, 32
    $region25: #{tpu_custom_call.1} parent=1 // pred_fallthru
      _
    // Predicated region
    $region26: #{tpu_custom_call.1} parent=1 // pred_check
      _
    $region27: #{tpu_custom_call.1} parent=1 // pred_check_branch
      %64 = sbr.rel (0) target = $region29
    $region28: #{tpu_custom_call.1} parent=1 // pred_region
      _
    $region29: #{tpu_custom_call.1} parent=1 // pred_fallthru
      _
    // Predicated region
    $region30: #{tpu_custom_call.1} parent=1 // pred_check
      _
    $region31: #{tpu_custom_call.1} parent=1 // pred_check_branch
      %66 = sbr.rel (0) target = $region33
    $region32: #{tpu_custom_call.1} parent=1 // pred_region
      %68 = vsyncadd [#allocation11], 0
      %s69 = sshll.u32 %s7, 4
      %s70 = int_to_ptr.hbm [resolvable:$true] %s69
      %s71 = sshll.u32 [#allocation10], 4
      %s72 = int_to_ptr.vmem [resolvable:$true] %s71
      %77 = dma.hbm_to_vmem [thread:$0]  %s70, 2048, %s72, [#allocation11], 128, 128, 8
    $region33: #{tpu_custom_call.1} parent=1 // pred_fallthru
      _
    // Predicated region
    $region34: #{tpu_custom_call.1} parent=1 // pred_check
      _
    $region35: #{tpu_custom_call.1} parent=1 // pred_check_branch
      %79 = sbr.rel (0) target = $region37
    $region36: #{tpu_custom_call.1} parent=1 // pred_region
      _
    $region37: #{tpu_custom_call.1} parent=1 // pred_fallthru
      _
    // Predicated region
    $region38: #{tpu_custom_call.1} parent=1 // pred_check
      _
    $region39: #{tpu_custom_call.1} parent=1 // pred_check_branch
      %81 = sbr.rel (0) target = $region41
    $region40: #{tpu_custom_call.1} parent=1 // pred_region
      %83 = dma.done [#allocation5], 2048
    $region41: #{tpu_custom_call.1} parent=1 // pred_fallthru
      _
    // Predicated region
    $region42: #{tpu_custom_call.1} parent=1 // pred_check
      _
    $region43: #{tpu_custom_call.1} parent=1 // pred_check_branch
      %85 = sbr.rel (0) target = $region45
    $region44: #{tpu_custom_call.1} parent=1 // pred_region
      %87 = dma.done [#allocation8], 8192
    $region45: #{tpu_custom_call.1} parent=1 // pred_fallthru
      _
    // Predicated region
    $region46: #{tpu_custom_call.1} parent=1 // pred_check
      _
    $region47: #{tpu_custom_call.1} parent=1 // pred_check_branch
      %89 = sbr.rel (0) target = $region49
    $region48: #{tpu_custom_call.1} parent=1 // pred_region
      %91 = dma.done [#allocation8], 8192
    $region49: #{tpu_custom_call.1} parent=1 // pred_fallthru
      _
    // Predicated region
    $region50: #{tpu_custom_call.1} parent=1 // pred_check
      _
    $region51: #{tpu_custom_call.1} parent=1 // pred_check_branch
      %93 = sbr.rel (0) target = $region53
    $region52: #{tpu_custom_call.1} parent=1 // pred_region
      %95 = dma.done [#allocation11], 2048
    $region53: #{tpu_custom_call.1} parent=1 // pred_fallthru
      _
    %v96 = vld [vmem:[%s0] sm:$0xff]
    %v97 = vld [vmem:[%s0 + $0x8] sm:$0xff]
    %v98 = vld [vmem:[%s0 + $0x10] sm:$0xff]
    %v99 = vld [vmem:[%s0 + $0x18] sm:$0xff]
    %v100 = vld [vmem:[%s0 + $0x20] sm:$0xff]
    %v101 = vld [vmem:[%s0 + $0x28] sm:$0xff]
    %v102 = vld [vmem:[%s0 + $0x30] sm:$0xff]
    %v103 = vld [vmem:[%s0 + $0x38] sm:$0xff]
    %v104 = vld [vmem:[%s1] sm:$0xf]
    %v105 = vld [vmem:[%s2] sm:$0x1]
    %v107 = vperm.slane %v105, 0
    %vm109 = vcmask 31744
    %v111 = vsel %vm109, %v96, 0
    %v114 = vsel %vm109, %v97, 0
    %v117 = vsel %vm109, %v98, 0
    %v120 = vsel %vm109, %v99, 0
    %v123 = vsel %vm109, %v100, 0
    %v126 = vsel %vm109, %v101, 0
    %v129 = vsel %vm109, %v102, 0
    %v132 = vsel %vm109, %v103, 0
    %vm134 = vcmask 1043456
    %v136 = vsel %vm134, %v104, 0
    %138 = vmatpush.msra.mxu0 0.0
    %139 = vmatpush.msra.mxu0 0.0
    %140 = vmatpush.msra.mxu0 0.0
    %141 = vmatpush.msra.mxu0 0.0
    %142 = vmatpush.msra.mxu0 0.0
    %143 = vmatpush.msra.mxu0 0.0
    %144 = vmatpush.msra.mxu0 0.0
    %145 = vmatpush.msra.mxu0 0.0
    %146 = vmatpush.msra.mxu0 0.0
    %147 = vmatpush.msra.mxu0 0.0
    %148 = vmatpush.msra.mxu0 0.0
    %149 = vmatpush.msra.mxu0 0.0
    %150 = vmatpush.msra.mxu0 0.0
    %151 = vmatpush.msra.mxu0 0.0
    %152 = vmatpush.msra.mxu0 0.0
    %153 = vmatpush.msra.mxu0 %v136
    %154 = vmatmul.f32.gmra.mxu0 %v111
    %v155 = vpop.f32.mrf.mxu0
    %v156 = vadd.f32 %v107, %v155
    %157 = vmatmul.f32.gmra.mxu0 %v114
    %v158 = vpop.f32.mrf.mxu0
    %v159 = vadd.f32 %v107, %v158
    %160 = vmatmul.f32.gmra.mxu0 %v117
    %v161 = vpop.f32.mrf.mxu0
    %v162 = vadd.f32 %v107, %v161
    %163 = vmatmul.f32.gmra.mxu0 %v120
    %v164 = vpop.f32.mrf.mxu0
    %v165 = vadd.f32 %v107, %v164
    %166 = vmatmul.f32.gmra.mxu0 %v123
    %v167 = vpop.f32.mrf.mxu0
    %v168 = vadd.f32 %v107, %v167
    %169 = vmatmul.f32.gmra.mxu0 %v126
    %v170 = vpop.f32.mrf.mxu0
    %v171 = vadd.f32 %v107, %v170
    %172 = vmatmul.f32.gmra.mxu0 %v129
    %v173 = vpop.f32.mrf.mxu0
    %v174 = vadd.f32 %v107, %v173
    %175 = vmatmul.f32.gmra.mxu0 %v132
    %v176 = vpop.f32.mrf.mxu0
    %v177 = vadd.f32 %v107, %v176
    %178 = vdwg.mxu0
    %179 = vst [vmem:[#allocation2] sm:$0xff] %v156
    %180 = vst [vmem:[#allocation2 + $0x8] sm:$0xff] %v159
    %181 = vst [vmem:[#allocation2 + $0x10] sm:$0xff] %v162
    %182 = vst [vmem:[#allocation2 + $0x18] sm:$0xff] %v165
    %183 = vst [vmem:[#allocation2 + $0x20] sm:$0xff] %v168
    %184 = vst [vmem:[#allocation2 + $0x28] sm:$0xff] %v171
    %185 = vst [vmem:[#allocation2 + $0x30] sm:$0xff] %v174
    %186 = vst [vmem:[#allocation2 + $0x38] sm:$0xff] %v177
    %v187 = vld [vmem:[#allocation4] sm:$0xff]
    %v188 = vld [vmem:[#allocation4 + $0x8] sm:$0xff]
    %v189 = vld [vmem:[#allocation4 + $0x10] sm:$0xff]
    %v190 = vld [vmem:[#allocation4 + $0x18] sm:$0xff]
    %v191 = vld [vmem:[#allocation4 + $0x20] sm:$0xff]
    %v192 = vld [vmem:[#allocation4 + $0x28] sm:$0xff]
    %v193 = vld [vmem:[#allocation4 + $0x30] sm:$0xff]
    %v194 = vld [vmem:[#allocation4 + $0x38] sm:$0xff]
    %v195 = vld [vmem:[#allocation4 + $0x40] sm:$0xff]
    %v196 = vld [vmem:[#allocation4 + $0x48] sm:$0xff]
    %v197 = vld [vmem:[#allocation4 + $0x50] sm:$0xff]
    %v198 = vld [vmem:[#allocation4 + $0x58] sm:$0xff]
    %v199 = vld [vmem:[#allocation4 + $0x60] sm:$0xff]
    %v200 = vld [vmem:[#allocation4 + $0x68] sm:$0xff]
    %v201 = vld [vmem:[#allocation4 + $0x70] sm:$0xff]
    %v202 = vld [vmem:[#allocation4 + $0x78] sm:$0xff]
    %v203 = vld [vmem:[#allocation9] sm:$0xff]
    %v204 = vld [vmem:[#allocation9 + $0x8] sm:$0xff]
    %v205 = vld [vmem:[#allocation9 + $0x10] sm:$0xff]
    %v206 = vld [vmem:[#allocation9 + $0x18] sm:$0xff]
    %v207 = vld [vmem:[#allocation9 + $0x20] sm:$0xff]
    %v208 = vld [vmem:[#allocation9 + $0x28] sm:$0xff]
    %v209 = vld [vmem:[#allocation9 + $0x30] sm:$0xff]
    %v210 = vld [vmem:[#allocation9 + $0x38] sm:$0xff]
    %v211 = vld [vmem:[#allocation9 + $0x40] sm:$0xff]
    %v212 = vld [vmem:[#allocation9 + $0x48] sm:$0xff]
    %v213 = vld [vmem:[#allocation9 + $0x50] sm:$0xff]
    %v214 = vld [vmem:[#allocation9 + $0x58] sm:$0xff]
    %v215 = vld [vmem:[#allocation9 + $0x60] sm:$0xff]
    %v216 = vld [vmem:[#allocation9 + $0x68] sm:$0xff]
    %v217 = vld [vmem:[#allocation9 + $0x70] sm:$0xff]
    %v218 = vld [vmem:[#allocation9 + $0x78] sm:$0xff]
    %v219 = vld [vmem:[#allocation9 + $0x80] sm:$0xff]
    %v220 = vld [vmem:[#allocation9 + $0x88] sm:$0xff]
    %v221 = vld [vmem:[#allocation9 + $0x90] sm:$0xff]
    %v222 = vld [vmem:[#allocation9 + $0x98] sm:$0xff]
    %v223 = vld [vmem:[#allocation9 + $0xa0] sm:$0xff]
    %v224 = vld [vmem:[#allocation9 + $0xa8] sm:$0xff]
    %v225 = vld [vmem:[#allocation9 + $0xb0] sm:$0xff]
    %v226 = vld [vmem:[#allocation9 + $0xb8] sm:$0xff]
    %v227 = vld [vmem:[#allocation9 + $0xc0] sm:$0xff]
    %v228 = vld [vmem:[#allocation9 + $0xc8] sm:$0xff]
    %v229 = vld [vmem:[#allocation9 + $0xd0] sm:$0xff]
    %v230 = vld [vmem:[#allocation9 + $0xd8] sm:$0xff]
    %v231 = vld [vmem:[#allocation9 + $0xe0] sm:$0xff]
    %v232 = vld [vmem:[#allocation9 + $0xe8] sm:$0xff]
    %v233 = vld [vmem:[#allocation9 + $0xf0] sm:$0xff]
    %v234 = vld [vmem:[#allocation9 + $0xf8] sm:$0xff]
    %v235 = vld [vmem:[#allocation9 + $0x100] sm:$0xff]
    %v236 = vld [vmem:[#allocation9 + $0x108] sm:$0xff]
    %v237 = vld [vmem:[#allocation9 + $0x110] sm:$0xff]
    %v238 = vld [vmem:[#allocation9 + $0x118] sm:$0xff]
    %v239 = vld [vmem:[#allocation9 + $0x120] sm:$0xff]
    %v240 = vld [vmem:[#allocation9 + $0x128] sm:$0xff]
    %v241 = vld [vmem:[#allocation9 + $0x130] sm:$0xff]
    %v242 = vld [vmem:[#allocation9 + $0x138] sm:$0xff]
    %v243 = vld [vmem:[#allocation9 + $0x140] sm:$0xff]
    %v244 = vld [vmem:[#allocation9 + $0x148] sm:$0xff]
    %v245 = vld [vmem:[#allocation9 + $0x150] sm:$0xff]
    %v246 = vld [vmem:[#allocation9 + $0x158] sm:$0xff]
    %v247 = vld [vmem:[#allocation9 + $0x160] sm:$0xff]
    %v248 = vld [vmem:[#allocation9 + $0x168] sm:$0xff]
    %v249 = vld [vmem:[#allocation9 + $0x170] sm:$0xff]
    %v250 = vld [vmem:[#allocation9 + $0x178] sm:$0xff]
    %v251 = vld [vmem:[#allocation9 + $0x180] sm:$0xff]
    %v252 = vld [vmem:[#allocation9 + $0x188] sm:$0xff]
    %v253 = vld [vmem:[#allocation9 + $0x190] sm:$0xff]
    %v254 = vld [vmem:[#allocation9 + $0x198] sm:$0xff]
    %v255 = vld [vmem:[#allocation9 + $0x1a0] sm:$0xff]
    %v256 = vld [vmem:[#allocation9 + $0x1a8] sm:$0xff]
    %v257 = vld [vmem:[#allocation9 + $0x1b0] sm:$0xff]
    %v258 = vld [vmem:[#allocation9 + $0x1b8] sm:$0xff]
    %v259 = vld [vmem:[#allocation9 + $0x1c0] sm:$0xff]
    %v260 = vld [vmem:[#allocation9 + $0x1c8] sm:$0xff]
    %v261 = vld [vmem:[#allocation9 + $0x1d0] sm:$0xff]
    %v262 = vld [vmem:[#allocation9 + $0x1d8] sm:$0xff]
    %v263 = vld [vmem:[#allocation9 + $0x1e0] sm:$0xff]
    %v264 = vld [vmem:[#allocation9 + $0x1e8] sm:$0xff]
    %v265 = vld [vmem:[#allocation9 + $0x1f0] sm:$0xff]
    %v266 = vld [vmem:[#allocation9 + $0x1f8] sm:$0xff]
    %v267 = vld [vmem:[#allocation2] sm:$0xff]
    %268 = vmatpush.msra.mxu0 %v202
    %269 = vmatpush.msra.mxu0 %v201
    %270 = vmatpush.msra.mxu0 %v200
    %271 = vmatpush.msra.mxu0 %v199
    %272 = vmatpush.msra.mxu0 %v198
    %273 = vmatpush.msra.mxu0 %v197
    %274 = vmatpush.msra.mxu0 %v196
    %275 = vmatpush.msra.mxu0 %v195
    %276 = vmatpush.msra.mxu0 %v194
    %277 = vmatpush.msra.mxu0 %v193
    %278 = vmatpush.msra.mxu0 %v192
    %279 = vmatpush.msra.mxu0 %v191
    %280 = vmatpush.msra.mxu0 %v190
    %281 = vmatpush.msra.mxu0 %v189
    %282 = vmatpush.msra.mxu0 %v188
    %283 = vmatpush.msra.mxu0 %v187
    %284 = vmatmul.f32.gmra.mxu0 0.0
    %v285 = vpop.f32.mrf.mxu0
    %v286 = vadd.f32 0.0, %v285
    %287 = vdwg.mxu0
    %v288 = vadd.f32 %v267, %v286
    %v289 = vtanh.pop %v288
    %290 = vst [vmem:[#allocation2] sm:$0xff] %v289
    %s291 = scalar_lea.vmem [#allocation2], 8
    %v292 = vld [vmem:[%s291] sm:$0xff]
    %293 = vmatpush.msra.mxu0 %v202
    %294 = vmatpush.msra.mxu0 %v201
    %295 = vmatpush.msra.mxu0 %v200
    %296 = vmatpush.msra.mxu0 %v199
    %297 = vmatpush.msra.mxu0 %v198
    %298 = vmatpush.msra.mxu0 %v197
    %299 = vmatpush.msra.mxu0 %v196
    %300 = vmatpush.msra.mxu0 %v195
    %301 = vmatpush.msra.mxu0 %v194
    %302 = vmatpush.msra.mxu0 %v193
    %303 = vmatpush.msra.mxu0 %v192
    %304 = vmatpush.msra.mxu0 %v191
    %305 = vmatpush.msra.mxu0 %v190
    %306 = vmatpush.msra.mxu0 %v189
    %307 = vmatpush.msra.mxu0 %v188
    %308 = vmatpush.msra.mxu0 %v187
    %309 = vmatmul.f32.gmra.mxu0 %v289
    %v310 = vpop.f32.mrf.mxu0
    %v311 = vadd.f32 0.0, %v310
    %312 = vdwg.mxu0
    %v313 = vadd.f32 %v292, %v311
    %v314 = vtanh.pop %v313
    %315 = vst [vmem:[%s291] sm:$0xff] %v314
    %s316 = scalar_lea.vmem [#allocation2], 16
    %v317 = vld [vmem:[%s316] sm:$0xff]
    %318 = vmatpush.msra.mxu0 %v202
    %319 = vmatpush.msra.mxu0 %v201
    %320 = vmatpush.msra.mxu0 %v200
    %321 = vmatpush.msra.mxu0 %v199
    %322 = vmatpush.msra.mxu0 %v198
    %323 = vmatpush.msra.mxu0 %v197
    %324 = vmatpush.msra.mxu0 %v196
    %325 = vmatpush.msra.mxu0 %v195
    %326 = vmatpush.msra.mxu0 %v194
    %327 = vmatpush.msra.mxu0 %v193
    %328 = vmatpush.msra.mxu0 %v192
    %329 = vmatpush.msra.mxu0 %v191
    %330 = vmatpush.msra.mxu0 %v190
    %331 = vmatpush.msra.mxu0 %v189
    %332 = vmatpush.msra.mxu0 %v188
    %333 = vmatpush.msra.mxu0 %v187
    %334 = vmatmul.f32.gmra.mxu0 %v314
    %v335 = vpop.f32.mrf.mxu0
    %v336 = vadd.f32 0.0, %v335
    %337 = vdwg.mxu0
    %v338 = vadd.f32 %v317, %v336
    %v339 = vtanh.pop %v338
    %340 = vst [vmem:[%s316] sm:$0xff] %v339
    %s341 = scalar_lea.vmem [#allocation2], 24
    %v342 = vld [vmem:[%s341] sm:$0xff]
    %343 = vmatpush.msra.mxu0 %v202
    %344 = vmatpush.msra.mxu0 %v201
    %345 = vmatpush.msra.mxu0 %v200
    %346 = vmatpush.msra.mxu0 %v199
    %347 = vmatpush.msra.mxu0 %v198
    %348 = vmatpush.msra.mxu0 %v197
    %349 = vmatpush.msra.mxu0 %v196
    %350 = vmatpush.msra.mxu0 %v195
    %351 = vmatpush.msra.mxu0 %v194
    %352 = vmatpush.msra.mxu0 %v193
    %353 = vmatpush.msra.mxu0 %v192
    %354 = vmatpush.msra.mxu0 %v191
    %355 = vmatpush.msra.mxu0 %v190
    %356 = vmatpush.msra.mxu0 %v189
    %357 = vmatpush.msra.mxu0 %v188
    %358 = vmatpush.msra.mxu0 %v187
    %359 = vmatmul.f32.gmra.mxu0 %v339
    %v360 = vpop.f32.mrf.mxu0
    %v361 = vadd.f32 0.0, %v360
    %362 = vdwg.mxu0
    %v363 = vadd.f32 %v342, %v361
    %v364 = vtanh.pop %v363
    %365 = vst [vmem:[%s341] sm:$0xff] %v364
    %s366 = scalar_lea.vmem [#allocation2], 32
    %v367 = vld [vmem:[%s366] sm:$0xff]
    %368 = vmatpush.msra.mxu0 %v202
    %369 = vmatpush.msra.mxu0 %v201
    %370 = vmatpush.msra.mxu0 %v200
    %371 = vmatpush.msra.mxu0 %v199
    %372 = vmatpush.msra.mxu0 %v198
    %373 = vmatpush.msra.mxu0 %v197
    %374 = vmatpush.msra.mxu0 %v196
    %375 = vmatpush.msra.mxu0 %v195
    %376 = vmatpush.msra.mxu0 %v194
    %377 = vmatpush.msra.mxu0 %v193
    %378 = vmatpush.msra.mxu0 %v192
    %379 = vmatpush.msra.mxu0 %v191
    %380 = vmatpush.msra.mxu0 %v190
    %381 = vmatpush.msra.mxu0 %v189
    %382 = vmatpush.msra.mxu0 %v188
    %383 = vmatpush.msra.mxu0 %v187
    %384 = vmatmul.f32.gmra.mxu0 %v364
    %v385 = vpop.f32.mrf.mxu0
    %v386 = vadd.f32 0.0, %v385
    %387 = vdwg.mxu0
    %v388 = vadd.f32 %v367, %v386
    %v389 = vtanh.pop %v388
    %390 = vst [vmem:[%s366] sm:$0xff] %v389
    %s391 = scalar_lea.vmem [#allocation2], 40
    %v392 = vld [vmem:[%s391] sm:$0xff]
    %393 = vmatpush.msra.mxu0 %v202
    %394 = vmatpush.msra.mxu0 %v201
    %395 = vmatpush.msra.mxu0 %v200
    %396 = vmatpush.msra.mxu0 %v199
    %397 = vmatpush.msra.mxu0 %v198
    %398 = vmatpush.msra.mxu0 %v197
    %399 = vmatpush.msra.mxu0 %v196
    %400 = vmatpush.msra.mxu0 %v195
    %401 = vmatpush.msra.mxu0 %v194
    %402 = vmatpush.msra.mxu0 %v193
    %403 = vmatpush.msra.mxu0 %v192
    %404 = vmatpush.msra.mxu0 %v191
    %405 = vmatpush.msra.mxu0 %v190
    %406 = vmatpush.msra.mxu0 %v189
    %407 = vmatpush.msra.mxu0 %v188
    %408 = vmatpush.msra.mxu0 %v187
    %409 = vmatmul.f32.gmra.mxu0 %v389
    %v410 = vpop.f32.mrf.mxu0
    %v411 = vadd.f32 0.0, %v410
    %412 = vdwg.mxu0
    %v413 = vadd.f32 %v392, %v411
    %v414 = vtanh.pop %v413
    %415 = vst [vmem:[%s391] sm:$0xff] %v414
    %s416 = scalar_lea.vmem [#allocation2], 48
    %v417 = vld [vmem:[%s416] sm:$0xff]
    %418 = vmatpush.msra.mxu0 %v202
    %419 = vmatpush.msra.mxu0 %v201
    %420 = vmatpush.msra.mxu0 %v200
    %421 = vmatpush.msra.mxu0 %v199
    %422 = vmatpush.msra.mxu0 %v198
    %423 = vmatpush.msra.mxu0 %v197
    %424 = vmatpush.msra.mxu0 %v196
    %425 = vmatpush.msra.mxu0 %v195
    %426 = vmatpush.msra.mxu0 %v194
    %427 = vmatpush.msra.mxu0 %v193
    %428 = vmatpush.msra.mxu0 %v192
    %429 = vmatpush.msra.mxu0 %v191
    %430 = vmatpush.msra.mxu0 %v190
    %431 = vmatpush.msra.mxu0 %v189
    %432 = vmatpush.msra.mxu0 %v188
    %433 = vmatpush.msra.mxu0 %v187
    %434 = vmatmul.f32.gmra.mxu0 %v414
    %v435 = vpop.f32.mrf.mxu0
    %v436 = vadd.f32 0.0, %v435
    %437 = vdwg.mxu0
    %v438 = vadd.f32 %v417, %v436
    %v439 = vtanh.pop %v438
    %440 = vst [vmem:[%s416] sm:$0xff] %v439
    %s441 = scalar_lea.vmem [#allocation2], 56
    %v442 = vld [vmem:[%s441] sm:$0xff]
    %443 = vmatpush.msra.mxu0 %v202
    %444 = vmatpush.msra.mxu0 %v201
    %445 = vmatpush.msra.mxu0 %v200
    %446 = vmatpush.msra.mxu0 %v199
    %447 = vmatpush.msra.mxu0 %v198
    %448 = vmatpush.msra.mxu0 %v197
    %449 = vmatpush.msra.mxu0 %v196
    %450 = vmatpush.msra.mxu0 %v195
    %451 = vmatpush.msra.mxu0 %v194
    %452 = vmatpush.msra.mxu0 %v193
    %453 = vmatpush.msra.mxu0 %v192
    %454 = vmatpush.msra.mxu0 %v191
    %455 = vmatpush.msra.mxu0 %v190
    %456 = vmatpush.msra.mxu0 %v189
    %457 = vmatpush.msra.mxu0 %v188
    %458 = vmatpush.msra.mxu0 %v187
    %459 = vmatmul.f32.gmra.mxu0 %v439
    %v460 = vpop.f32.mrf.mxu0
    %v461 = vadd.f32 0.0, %v460
    %462 = vdwg.mxu0
    %v463 = vadd.f32 %v442, %v461
    %v464 = vtanh.pop %v463
    %465 = vst [vmem:[%s441] sm:$0xff] %v464
    %v466 = vld [vmem:[#allocation2] sm:$0xff]
    %v467 = vld [vmem:[#allocation2 + $0x8] sm:$0xff]
    %v468 = vld [vmem:[#allocation2 + $0x10] sm:$0xff]
    %v469 = vld [vmem:[#allocation2 + $0x18] sm:$0xff]
    %v470 = vld [vmem:[#allocation2 + $0x20] sm:$0xff]
    %v471 = vld [vmem:[#allocation2 + $0x28] sm:$0xff]
    %v472 = vld [vmem:[#allocation2 + $0x30] sm:$0xff]
    %v473 = vld [vmem:[#allocation2 + $0x38] sm:$0xff]
    %v474 = vld [vmem:[#allocation7] sm:$0xff]
    %v475 = vld [vmem:[#allocation7 + $0x8] sm:$0xff]
    %v476 = vld [vmem:[#allocation7 + $0x10] sm:$0xff]
    %v477 = vld [vmem:[#allocation7 + $0x18] sm:$0xff]
    %v478 = vld [vmem:[#allocation7 + $0x20] sm:$0xff]
    %v479 = vld [vmem:[#allocation7 + $0x28] sm:$0xff]
    %v480 = vld [vmem:[#allocation7 + $0x30] sm:$0xff]
    %v481 = vld [vmem:[#allocation7 + $0x38] sm:$0xff]
    %v482 = vld [vmem:[#allocation7 + $0x40] sm:$0xff]
    %v483 = vld [vmem:[#allocation7 + $0x48] sm:$0xff]
    %v484 = vld [vmem:[#allocation7 + $0x50] sm:$0xff]
    %v485 = vld [vmem:[#allocation7 + $0x58] sm:$0xff]
    %v486 = vld [vmem:[#allocation7 + $0x60] sm:$0xff]
    %v487 = vld [vmem:[#allocation7 + $0x68] sm:$0xff]
    %v488 = vld [vmem:[#allocation7 + $0x70] sm:$0xff]
    %v489 = vld [vmem:[#allocation7 + $0x78] sm:$0xff]
    %v490 = vld [vmem:[#allocation7 + $0x80] sm:$0xff]
    %v491 = vld [vmem:[#allocation7 + $0x88] sm:$0xff]
    %v492 = vld [vmem:[#allocation7 + $0x90] sm:$0xff]
    %v493 = vld [vmem:[#allocation7 + $0x98] sm:$0xff]
    %v494 = vld [vmem:[#allocation7 + $0xa0] sm:$0xff]
    %v495 = vld [vmem:[#allocation7 + $0xa8] sm:$0xff]
    %v496 = vld [vmem:[#allocation7 + $0xb0] sm:$0xff]
    %v497 = vld [vmem:[#allocation7 + $0xb8] sm:$0xff]
    %v498 = vld [vmem:[#allocation7 + $0xc0] sm:$0xff]
    %v499 = vld [vmem:[#allocation7 + $0xc8] sm:$0xff]
    %v500 = vld [vmem:[#allocation7 + $0xd0] sm:$0xff]
    %v501 = vld [vmem:[#allocation7 + $0xd8] sm:$0xff]
    %v502 = vld [vmem:[#allocation7 + $0xe0] sm:$0xff]
    %v503 = vld [vmem:[#allocation7 + $0xe8] sm:$0xff]
    %v504 = vld [vmem:[#allocation7 + $0xf0] sm:$0xff]
    %v505 = vld [vmem:[#allocation7 + $0xf8] sm:$0xff]
    %v506 = vld [vmem:[#allocation7 + $0x100] sm:$0xff]
    %v507 = vld [vmem:[#allocation7 + $0x108] sm:$0xff]
    %v508 = vld [vmem:[#allocation7 + $0x110] sm:$0xff]
    %v509 = vld [vmem:[#allocation7 + $0x118] sm:$0xff]
    %v510 = vld [vmem:[#allocation7 + $0x120] sm:$0xff]
    %v511 = vld [vmem:[#allocation7 + $0x128] sm:$0xff]
    %v512 = vld [vmem:[#allocation7 + $0x130] sm:$0xff]
    %v513 = vld [vmem:[#allocation7 + $0x138] sm:$0xff]
    %v514 = vld [vmem:[#allocation7 + $0x140] sm:$0xff]
    %v515 = vld [vmem:[#allocation7 + $0x148] sm:$0xff]
    %v516 = vld [vmem:[#allocation7 + $0x150] sm:$0xff]
    %v517 = vld [vmem:[#allocation7 + $0x158] sm:$0xff]
    %v518 = vld [vmem:[#allocation7 + $0x160] sm:$0xff]
    %v519 = vld [vmem:[#allocation7 + $0x168] sm:$0xff]
    %v520 = vld [vmem:[#allocation7 + $0x170] sm:$0xff]
    %v521 = vld [vmem:[#allocation7 + $0x178] sm:$0xff]
    %v522 = vld [vmem:[#allocation7 + $0x180] sm:$0xff]
    %v523 = vld [vmem:[#allocation7 + $0x188] sm:$0xff]
    %v524 = vld [vmem:[#allocation7 + $0x190] sm:$0xff]
    %v525 = vld [vmem:[#allocation7 + $0x198] sm:$0xff]
    %v526 = vld [vmem:[#allocation7 + $0x1a0] sm:$0xff]
    %v527 = vld [vmem:[#allocation7 + $0x1a8] sm:$0xff]
    %v528 = vld [vmem:[#allocation7 + $0x1b0] sm:$0xff]
    %v529 = vld [vmem:[#allocation7 + $0x1b8] sm:$0xff]
    %v530 = vld [vmem:[#allocation7 + $0x1c0] sm:$0xff]
    %v531 = vld [vmem:[#allocation7 + $0x1c8] sm:$0xff]
    %v532 = vld [vmem:[#allocation7 + $0x1d0] sm:$0xff]
    %v533 = vld [vmem:[#allocation7 + $0x1d8] sm:$0xff]
    %v534 = vld [vmem:[#allocation7 + $0x1e0] sm:$0xff]
    %v535 = vld [vmem:[#allocation7 + $0x1e8] sm:$0xff]
    %v536 = vld [vmem:[#allocation7 + $0x1f0] sm:$0xff]
    %v537 = vld [vmem:[#allocation7 + $0x1f8] sm:$0xff]
    %v538 = vld [vmem:[%s6] sm:$0xf]
    %v540 = vperm.slane %v538, 0
    %v541 = vperm.slane %v538, 1
    %v542 = vperm.slane %v538, 2
    %v543 = vperm.slane %v538, 3
    %548 = vmatpush.msra.mxu0 %v534
    %549 = vmatpush.msra.mxu0 %v530
    %550 = vmatpush.msra.mxu0 %v526
    %551 = vmatpush.msra.mxu0 %v522
    %552 = vmatpush.msra.mxu0 %v518
    %553 = vmatpush.msra.mxu0 %v514
    %554 = vmatpush.msra.mxu0 %v510
    %555 = vmatpush.msra.mxu0 %v506
    %556 = vmatpush.msra.mxu0 %v502
    %557 = vmatpush.msra.mxu0 %v498
    %558 = vmatpush.msra.mxu0 %v494
    %559 = vmatpush.msra.mxu0 %v490
    %560 = vmatpush.msra.mxu0 %v486
    %561 = vmatpush.msra.mxu0 %v482
    %562 = vmatpush.msra.mxu0 %v478
    %563 = vmatpush.msra.mxu0 %v474
    %564 = vmatmul.f32.gmra.mxu0 %v466
    %v565 = vpop.f32.mrf.mxu0
    %v566 = vadd.f32 %v540, %v565
    %567 = vmatmul.f32.gmra.mxu0 %v467
    %v568 = vpop.f32.mrf.mxu0
    %v569 = vadd.f32 %v540, %v568
    %570 = vmatmul.f32.gmra.mxu0 %v468
    %v571 = vpop.f32.mrf.mxu0
    %v572 = vadd.f32 %v540, %v571
    %573 = vmatmul.f32.gmra.mxu0 %v469
    %v574 = vpop.f32.mrf.mxu0
    %v575 = vadd.f32 %v540, %v574
    %576 = vmatmul.f32.gmra.mxu0 %v470
    %v577 = vpop.f32.mrf.mxu0
    %v578 = vadd.f32 %v540, %v577
    %579 = vmatmul.f32.gmra.mxu0 %v471
    %v580 = vpop.f32.mrf.mxu0
    %v581 = vadd.f32 %v540, %v580
    %582 = vmatmul.f32.gmra.mxu0 %v472
    %v583 = vpop.f32.mrf.mxu0
    %v584 = vadd.f32 %v540, %v583
    %585 = vmatmul.f32.gmra.mxu0 %v473
    %v586 = vpop.f32.mrf.mxu0
    %v587 = vadd.f32 %v540, %v586
    %588 = vdwg.mxu0
    %589 = vmatpush.msra.mxu0 %v535
    %590 = vmatpush.msra.mxu0 %v531
    %591 = vmatpush.msra.mxu0 %v527
    %592 = vmatpush.msra.mxu0 %v523
    %593 = vmatpush.msra.mxu0 %v519
    %594 = vmatpush.msra.mxu0 %v515
    %595 = vmatpush.msra.mxu0 %v511
    %596 = vmatpush.msra.mxu0 %v507
    %597 = vmatpush.msra.mxu0 %v503
    %598 = vmatpush.msra.mxu0 %v499
    %599 = vmatpush.msra.mxu0 %v495
    %600 = vmatpush.msra.mxu0 %v491
    %601 = vmatpush.msra.mxu0 %v487
    %602 = vmatpush.msra.mxu0 %v483
    %603 = vmatpush.msra.mxu0 %v479
    %604 = vmatpush.msra.mxu0 %v475
    %605 = vmatmul.f32.gmra.mxu0 %v466
    %v606 = vpop.f32.mrf.mxu0
    %v607 = vadd.f32 %v541, %v606
    %608 = vmatmul.f32.gmra.mxu0 %v467
    %v609 = vpop.f32.mrf.mxu0
    %v610 = vadd.f32 %v541, %v609
    %611 = vmatmul.f32.gmra.mxu0 %v468
    %v612 = vpop.f32.mrf.mxu0
    %v613 = vadd.f32 %v541, %v612
    %614 = vmatmul.f32.gmra.mxu0 %v469
    %v615 = vpop.f32.mrf.mxu0
    %v616 = vadd.f32 %v541, %v615
    %617 = vmatmul.f32.gmra.mxu0 %v470
    %v618 = vpop.f32.mrf.mxu0
    %v619 = vadd.f32 %v541, %v618
    %620 = vmatmul.f32.gmra.mxu0 %v471
    %v621 = vpop.f32.mrf.mxu0
    %v622 = vadd.f32 %v541, %v621
    %623 = vmatmul.f32.gmra.mxu0 %v472
    %v624 = vpop.f32.mrf.mxu0
    %v625 = vadd.f32 %v541, %v624
    %626 = vmatmul.f32.gmra.mxu0 %v473
    %v627 = vpop.f32.mrf.mxu0
    %v628 = vadd.f32 %v541, %v627
    %629 = vdwg.mxu0
    %630 = vmatpush.msra.mxu0 %v536
    %631 = vmatpush.msra.mxu0 %v532
    %632 = vmatpush.msra.mxu0 %v528
    %633 = vmatpush.msra.mxu0 %v524
    %634 = vmatpush.msra.mxu0 %v520
    %635 = vmatpush.msra.mxu0 %v516
    %636 = vmatpush.msra.mxu0 %v512
    %637 = vmatpush.msra.mxu0 %v508
    %638 = vmatpush.msra.mxu0 %v504
    %639 = vmatpush.msra.mxu0 %v500
    %640 = vmatpush.msra.mxu0 %v496
    %641 = vmatpush.msra.mxu0 %v492
    %642 = vmatpush.msra.mxu0 %v488
    %643 = vmatpush.msra.mxu0 %v484
    %644 = vmatpush.msra.mxu0 %v480
    %645 = vmatpush.msra.mxu0 %v476
    %646 = vmatmul.f32.gmra.mxu0 %v466
    %v647 = vpop.f32.mrf.mxu0
    %v648 = vadd.f32 %v542, %v647
    %649 = vmatmul.f32.gmra.mxu0 %v467
    %v650 = vpop.f32.mrf.mxu0
    %v651 = vadd.f32 %v542, %v650
    %652 = vmatmul.f32.gmra.mxu0 %v468
    %v653 = vpop.f32.mrf.mxu0
    %v654 = vadd.f32 %v542, %v653
    %655 = vmatmul.f32.gmra.mxu0 %v469
    %v656 = vpop.f32.mrf.mxu0
    %v657 = vadd.f32 %v542, %v656
    %658 = vmatmul.f32.gmra.mxu0 %v470
    %v659 = vpop.f32.mrf.mxu0
    %v660 = vadd.f32 %v542, %v659
    %661 = vmatmul.f32.gmra.mxu0 %v471
    %v662 = vpop.f32.mrf.mxu0
    %v663 = vadd.f32 %v542, %v662
    %664 = vmatmul.f32.gmra.mxu0 %v472
    %v665 = vpop.f32.mrf.mxu0
    %v666 = vadd.f32 %v542, %v665
    %667 = vmatmul.f32.gmra.mxu0 %v473
    %v668 = vpop.f32.mrf.mxu0
    %v669 = vadd.f32 %v542, %v668
    %670 = vdwg.mxu0
    %671 = vmatpush.msra.mxu0 %v537
    %672 = vmatpush.msra.mxu0 %v533
    %673 = vmatpush.msra.mxu0 %v529
    %674 = vmatpush.msra.mxu0 %v525
    %675 = vmatpush.msra.mxu0 %v521
    %676 = vmatpush.msra.mxu0 %v517
    %677 = vmatpush.msra.mxu0 %v513
    %678 = vmatpush.msra.mxu0 %v509
    %679 = vmatpush.msra.mxu0 %v505
    %680 = vmatpush.msra.mxu0 %v501
    %681 = vmatpush.msra.mxu0 %v497
    %682 = vmatpush.msra.mxu0 %v493
    %683 = vmatpush.msra.mxu0 %v489
    %684 = vmatpush.msra.mxu0 %v485
    %685 = vmatpush.msra.mxu0 %v481
    %686 = vmatpush.msra.mxu0 %v477
    %687 = vmatmul.f32.gmra.mxu0 %v466
    %v688 = vpop.f32.mrf.mxu0
    %v689 = vadd.f32 %v543, %v688
    %690 = vmatmul.f32.gmra.mxu0 %v467
    %v691 = vpop.f32.mrf.mxu0
    %v692 = vadd.f32 %v543, %v691
    %693 = vmatmul.f32.gmra.mxu0 %v468
    %v694 = vpop.f32.mrf.mxu0
    %v695 = vadd.f32 %v543, %v694
    %696 = vmatmul.f32.gmra.mxu0 %v469
    %v697 = vpop.f32.mrf.mxu0
    %v698 = vadd.f32 %v543, %v697
    %699 = vmatmul.f32.gmra.mxu0 %v470
    %v700 = vpop.f32.mrf.mxu0
    %v701 = vadd.f32 %v543, %v700
    %702 = vmatmul.f32.gmra.mxu0 %v471
    %v703 = vpop.f32.mrf.mxu0
    %v704 = vadd.f32 %v543, %v703
    %705 = vmatmul.f32.gmra.mxu0 %v472
    %v706 = vpop.f32.mrf.mxu0
    %v707 = vadd.f32 %v543, %v706
    %708 = vmatmul.f32.gmra.mxu0 %v473
    %v709 = vpop.f32.mrf.mxu0
    %v710 = vadd.f32 %v543, %v709
    %711 = vdwg.mxu0
    %712 = vst [vmem:[#allocation3] sm:$0xff] %v566
    %713 = vst [vmem:[#allocation3 + $0x8] sm:$0xff] %v607
    %714 = vst [vmem:[#allocation3 + $0x10] sm:$0xff] %v648
    %715 = vst [vmem:[#allocation3 + $0x18] sm:$0xff] %v689
    %716 = vst [vmem:[#allocation3 + $0x20] sm:$0xff] %v569
    %717 = vst [vmem:[#allocation3 + $0x28] sm:$0xff] %v610
    %718 = vst [vmem:[#allocation3 + $0x30] sm:$0xff] %v651
    %719 = vst [vmem:[#allocation3 + $0x38] sm:$0xff] %v692
    %720 = vst [vmem:[#allocation3 + $0x40] sm:$0xff] %v572
    %721 = vst [vmem:[#allocation3 + $0x48] sm:$0xff] %v613
    %722 = vst [vmem:[#allocation3 + $0x50] sm:$0xff] %v654
    %723 = vst [vmem:[#allocation3 + $0x58] sm:$0xff] %v695
    %724 = vst [vmem:[#allocation3 + $0x60] sm:$0xff] %v575
    %725 = vst [vmem:[#allocation3 + $0x68] sm:$0xff] %v616
    %726 = vst [vmem:[#allocation3 + $0x70] sm:$0xff] %v657
    %727 = vst [vmem:[#allocation3 + $0x78] sm:$0xff] %v698
    %728 = vst [vmem:[#allocation3 + $0x80] sm:$0xff] %v578
    %729 = vst [vmem:[#allocation3 + $0x88] sm:$0xff] %v619
    %730 = vst [vmem:[#allocation3 + $0x90] sm:$0xff] %v660
    %731 = vst [vmem:[#allocation3 + $0x98] sm:$0xff] %v701
    %732 = vst [vmem:[#allocation3 + $0xa0] sm:$0xff] %v581
    %733 = vst [vmem:[#allocation3 + $0xa8] sm:$0xff] %v622
    %734 = vst [vmem:[#allocation3 + $0xb0] sm:$0xff] %v663
    %735 = vst [vmem:[#allocation3 + $0xb8] sm:$0xff] %v704
    %736 = vst [vmem:[#allocation3 + $0xc0] sm:$0xff] %v584
    %737 = vst [vmem:[#allocation3 + $0xc8] sm:$0xff] %v625
    %738 = vst [vmem:[#allocation3 + $0xd0] sm:$0xff] %v666
    %739 = vst [vmem:[#allocation3 + $0xd8] sm:$0xff] %v707
    %740 = vst [vmem:[#allocation3 + $0xe0] sm:$0xff] %v587
    %741 = vst [vmem:[#allocation3 + $0xe8] sm:$0xff] %v628
    %742 = vst [vmem:[#allocation3 + $0xf0] sm:$0xff] %v669
    %743 = vst [vmem:[#allocation3 + $0xf8] sm:$0xff] %v710
    %s744 = smul.u32 0, 4
    %s745 = smul.addr %s744, 8
    %s746 = scalar_lea.vmem [#allocation3], %s745
    %v747 = vld [vmem:[%s746] sm:$0xff]
    %v748 = vld [vmem:[%s746 + $0x8] sm:$0xff]
    %v749 = vld [vmem:[%s746 + $0x10] sm:$0xff]
    %v750 = vld [vmem:[%s746 + $0x18] sm:$0xff]
    %751 = vmatpush.msra.mxu0 %v263
    %752 = vmatpush.msra.mxu0 %v259
    %753 = vmatpush.msra.mxu0 %v255
    %754 = vmatpush.msra.mxu0 %v251
    %755 = vmatpush.msra.mxu0 %v247
    %756 = vmatpush.msra.mxu0 %v243
    %757 = vmatpush.msra.mxu0 %v239
    %758 = vmatpush.msra.mxu0 %v235
    %759 = vmatpush.msra.mxu0 %v231
    %760 = vmatpush.msra.mxu0 %v227
    %761 = vmatpush.msra.mxu0 %v223
    %762 = vmatpush.msra.mxu0 %v219
    %763 = vmatpush.msra.mxu0 %v215
    %764 = vmatpush.msra.mxu0 %v211
    %765 = vmatpush.msra.mxu0 %v207
    %766 = vmatpush.msra.mxu0 %v203
    %767 = vmatmul.f32.gmra.mxu0 0.0
    %v768 = vpop.f32.mrf.mxu0
    %v769 = vadd.f32 0.0, %v768
    %770 = vdwg.mxu0
    %771 = vmatpush.msra.mxu0 %v264
    %772 = vmatpush.msra.mxu0 %v260
    %773 = vmatpush.msra.mxu0 %v256
    %774 = vmatpush.msra.mxu0 %v252
    %775 = vmatpush.msra.mxu0 %v248
    %776 = vmatpush.msra.mxu0 %v244
    %777 = vmatpush.msra.mxu0 %v240
    %778 = vmatpush.msra.mxu0 %v236
    %779 = vmatpush.msra.mxu0 %v232
    %780 = vmatpush.msra.mxu0 %v228
    %781 = vmatpush.msra.mxu0 %v224
    %782 = vmatpush.msra.mxu0 %v220
    %783 = vmatpush.msra.mxu0 %v216
    %784 = vmatpush.msra.mxu0 %v212
    %785 = vmatpush.msra.mxu0 %v208
    %786 = vmatpush.msra.mxu0 %v204
    %787 = vmatmul.f32.gmra.mxu0 0.0
    %v788 = vpop.f32.mrf.mxu0
    %v789 = vadd.f32 0.0, %v788
    %790 = vdwg.mxu0
    %791 = vmatpush.msra.mxu0 %v265
    %792 = vmatpush.msra.mxu0 %v261
    %793 = vmatpush.msra.mxu0 %v257
    %794 = vmatpush.msra.mxu0 %v253
    %795 = vmatpush.msra.mxu0 %v249
    %796 = vmatpush.msra.mxu0 %v245
    %797 = vmatpush.msra.mxu0 %v241
    %798 = vmatpush.msra.mxu0 %v237
    %799 = vmatpush.msra.mxu0 %v233
    %800 = vmatpush.msra.mxu0 %v229
    %801 = vmatpush.msra.mxu0 %v225
    %802 = vmatpush.msra.mxu0 %v221
    %803 = vmatpush.msra.mxu0 %v217
    %804 = vmatpush.msra.mxu0 %v213
    %805 = vmatpush.msra.mxu0 %v209
    %806 = vmatpush.msra.mxu0 %v205
    %807 = vmatmul.f32.gmra.mxu0 0.0
    %v808 = vpop.f32.mrf.mxu0
    %v809 = vadd.f32 0.0, %v808
    %810 = vdwg.mxu0
    %811 = vmatpush.msra.mxu0 %v266
    %812 = vmatpush.msra.mxu0 %v262
    %813 = vmatpush.msra.mxu0 %v258
    %814 = vmatpush.msra.mxu0 %v254
    %815 = vmatpush.msra.mxu0 %v250
    %816 = vmatpush.msra.mxu0 %v246
    %817 = vmatpush.msra.mxu0 %v242
    %818 = vmatpush.msra.mxu0 %v238
    %819 = vmatpush.msra.mxu0 %v234
    %820 = vmatpush.msra.mxu0 %v230
    %821 = vmatpush.msra.mxu0 %v226
    %822 = vmatpush.msra.mxu0 %v222
    %823 = vmatpush.msra.mxu0 %v218
    %824 = vmatpush.msra.mxu0 %v214
    %825 = vmatpush.msra.mxu0 %v210
    %826 = vmatpush.msra.mxu0 %v206
    %827 = vmatmul.f32.gmra.mxu0 0.0
    %v828 = vpop.f32.mrf.mxu0
    %v829 = vadd.f32 0.0, %v828
    %830 = vdwg.mxu0
    %v831 = vadd.f32 %v747, %v769
    %v832 = vadd.f32 %v748, %v789
    %v833 = vadd.f32 %v749, %v809
    %v834 = vadd.f32 %v750, %v829
    %v835 = vmul.f32 %v831, 0.5
    %v836 = vtanh.pop %v835
    %v837 = vmul.f32 %v836, 0.5
    %v838 = vadd.f32 %v837, 0.5
    %v839 = vmul.f32 %v832, 0.5
    %v840 = vtanh.pop %v839
    %v841 = vmul.f32 %v840, 0.5
    %v842 = vadd.f32 %v841, 0.5
    %v843 = vtanh.pop %v833
    %v844 = vmul.f32 %v834, 0.5
    %v845 = vtanh.pop %v844
    %v846 = vmul.f32 %v845, 0.5
    %v847 = vadd.f32 %v846, 0.5
    %v848 = vmul.f32 %v842, 0.0
    %v849 = vmul.f32 %v838, %v843
    %v850 = vadd.f32 %v848, %v849
    %v851 = vtanh.pop %v850
    %v852 = vmul.f32 %v847, %v851
    %s853 = smul.u32 1, 4
    %s854 = smul.addr %s853, 8
    %s855 = scalar_lea.vmem [#allocation3], %s854
    %v856 = vld [vmem:[%s855] sm:$0xff]
    %v857 = vld [vmem:[%s855 + $0x8] sm:$0xff]
    %v858 = vld [vmem:[%s855 + $0x10] sm:$0xff]
    %v859 = vld [vmem:[%s855 + $0x18] sm:$0xff]
    %860 = vmatpush.msra.mxu0 %v263
    %861 = vmatpush.msra.mxu0 %v259
    %862 = vmatpush.msra.mxu0 %v255
    %863 = vmatpush.msra.mxu0 %v251
    %864 = vmatpush.msra.mxu0 %v247
    %865 = vmatpush.msra.mxu0 %v243
    %866 = vmatpush.msra.mxu0 %v239
    %867 = vmatpush.msra.mxu0 %v235
    %868 = vmatpush.msra.mxu0 %v231
    %869 = vmatpush.msra.mxu0 %v227
    %870 = vmatpush.msra.mxu0 %v223
    %871 = vmatpush.msra.mxu0 %v219
    %872 = vmatpush.msra.mxu0 %v215
    %873 = vmatpush.msra.mxu0 %v211
    %874 = vmatpush.msra.mxu0 %v207
    %875 = vmatpush.msra.mxu0 %v203
    %876 = vmatmul.f32.gmra.mxu0 %v852
    %v877 = vpop.f32.mrf.mxu0
    %v878 = vadd.f32 0.0, %v877
    %879 = vdwg.mxu0
    %880 = vmatpush.msra.mxu0 %v264
    %881 = vmatpush.msra.mxu0 %v260
    %882 = vmatpush.msra.mxu0 %v256
    %883 = vmatpush.msra.mxu0 %v252
    %884 = vmatpush.msra.mxu0 %v248
    %885 = vmatpush.msra.mxu0 %v244
    %886 = vmatpush.msra.mxu0 %v240
    %887 = vmatpush.msra.mxu0 %v236
    %888 = vmatpush.msra.mxu0 %v232
    %889 = vmatpush.msra.mxu0 %v228
    %890 = vmatpush.msra.mxu0 %v224
    %891 = vmatpush.msra.mxu0 %v220
    %892 = vmatpush.msra.mxu0 %v216
    %893 = vmatpush.msra.mxu0 %v212
    %894 = vmatpush.msra.mxu0 %v208
    %895 = vmatpush.msra.mxu0 %v204
    %896 = vmatmul.f32.gmra.mxu0 %v852
    %v897 = vpop.f32.mrf.mxu0
    %v898 = vadd.f32 0.0, %v897
    %899 = vdwg.mxu0
    %900 = vmatpush.msra.mxu0 %v265
    %901 = vmatpush.msra.mxu0 %v261
    %902 = vmatpush.msra.mxu0 %v257
    %903 = vmatpush.msra.mxu0 %v253
    %904 = vmatpush.msra.mxu0 %v249
    %905 = vmatpush.msra.mxu0 %v245
    %906 = vmatpush.msra.mxu0 %v241
    %907 = vmatpush.msra.mxu0 %v237
    %908 = vmatpush.msra.mxu0 %v233
    %909 = vmatpush.msra.mxu0 %v229
    %910 = vmatpush.msra.mxu0 %v225
    %911 = vmatpush.msra.mxu0 %v221
    %912 = vmatpush.msra.mxu0 %v217
    %913 = vmatpush.msra.mxu0 %v213
    %914 = vmatpush.msra.mxu0 %v209
    %915 = vmatpush.msra.mxu0 %v205
    %916 = vmatmul.f32.gmra.mxu0 %v852
    %v917 = vpop.f32.mrf.mxu0
    %v918 = vadd.f32 0.0, %v917
    %919 = vdwg.mxu0
    %920 = vmatpush.msra.mxu0 %v266
    %921 = vmatpush.msra.mxu0 %v262
    %922 = vmatpush.msra.mxu0 %v258
    %923 = vmatpush.msra.mxu0 %v254
    %924 = vmatpush.msra.mxu0 %v250
    %925 = vmatpush.msra.mxu0 %v246
    %926 = vmatpush.msra.mxu0 %v242
    %927 = vmatpush.msra.mxu0 %v238
    %928 = vmatpush.msra.mxu0 %v234
    %929 = vmatpush.msra.mxu0 %v230
    %930 = vmatpush.msra.mxu0 %v226
    %931 = vmatpush.msra.mxu0 %v222
    %932 = vmatpush.msra.mxu0 %v218
    %933 = vmatpush.msra.mxu0 %v214
    %934 = vmatpush.msra.mxu0 %v210
    %935 = vmatpush.msra.mxu0 %v206
    %936 = vmatmul.f32.gmra.mxu0 %v852
    %v937 = vpop.f32.mrf.mxu0
    %v938 = vadd.f32 0.0, %v937
    %939 = vdwg.mxu0
    %v940 = vadd.f32 %v856, %v878
    %v941 = vadd.f32 %v857, %v898
    %v942 = vadd.f32 %v858, %v918
    %v943 = vadd.f32 %v859, %v938
    %v944 = vmul.f32 %v940, 0.5
    %v945 = vtanh.pop %v944
    %v946 = vmul.f32 %v945, 0.5
    %v947 = vadd.f32 %v946, 0.5
    %v948 = vmul.f32 %v941, 0.5
    %v949 = vtanh.pop %v948
    %v950 = vmul.f32 %v949, 0.5
    %v951 = vadd.f32 %v950, 0.5
    %v952 = vtanh.pop %v942
    %v953 = vmul.f32 %v943, 0.5
    %v954 = vtanh.pop %v953
    %v955 = vmul.f32 %v954, 0.5
    %v956 = vadd.f32 %v955, 0.5
    %v957 = vmul.f32 %v951, %v850
    %v958 = vmul.f32 %v947, %v952
    %v959 = vadd.f32 %v957, %v958
    %v960 = vtanh.pop %v959
    %v961 = vmul.f32 %v956, %v960
    %s962 = smul.u32 2, 4
    %s963 = smul.addr %s962, 8
    %s964 = scalar_lea.vmem [#allocation3], %s963
    %v965 = vld [vmem:[%s964] sm:$0xff]
    %v966 = vld [vmem:[%s964 + $0x8] sm:$0xff]
    %v967 = vld [vmem:[%s964 + $0x10] sm:$0xff]
    %v968 = vld [vmem:[%s964 + $0x18] sm:$0xff]
    %969 = vmatpush.msra.mxu0 %v263
    %970 = vmatpush.msra.mxu0 %v259
    %971 = vmatpush.msra.mxu0 %v255
    %972 = vmatpush.msra.mxu0 %v251
    %973 = vmatpush.msra.mxu0 %v247
    %974 = vmatpush.msra.mxu0 %v243
    %975 = vmatpush.msra.mxu0 %v239
    %976 = vmatpush.msra.mxu0 %v235
    %977 = vmatpush.msra.mxu0 %v231
    %978 = vmatpush.msra.mxu0 %v227
    %979 = vmatpush.msra.mxu0 %v223
    %980 = vmatpush.msra.mxu0 %v219
    %981 = vmatpush.msra.mxu0 %v215
    %982 = vmatpush.msra.mxu0 %v211
    %983 = vmatpush.msra.mxu0 %v207
    %984 = vmatpush.msra.mxu0 %v203
    %985 = vmatmul.f32.gmra.mxu0 %v961
    %v986 = vpop.f32.mrf.mxu0
    %v987 = vadd.f32 0.0, %v986
    %988 = vdwg.mxu0
    %989 = vmatpush.msra.mxu0 %v264
    %990 = vmatpush.msra.mxu0 %v260
    %991 = vmatpush.msra.mxu0 %v256
    %992 = vmatpush.msra.mxu0 %v252
    %993 = vmatpush.msra.mxu0 %v248
    %994 = vmatpush.msra.mxu0 %v244
    %995 = vmatpush.msra.mxu0 %v240
    %996 = vmatpush.msra.mxu0 %v236
    %997 = vmatpush.msra.mxu0 %v232
    %998 = vmatpush.msra.mxu0 %v228
    %999 = vmatpush.msra.mxu0 %v224
    %1000 = vmatpush.msra.mxu0 %v220
    %1001 = vmatpush.msra.mxu0 %v216
    %1002 = vmatpush.msra.mxu0 %v212
    %1003 = vmatpush.msra.mxu0 %v208
    %1004 = vmatpush.msra.mxu0 %v204
    %1005 = vmatmul.f32.gmra.mxu0 %v961
    %v1006 = vpop.f32.mrf.mxu0
    %v1007 = vadd.f32 0.0, %v1006
    %1008 = vdwg.mxu0
    %1009 = vmatpush.msra.mxu0 %v265
    %1010 = vmatpush.msra.mxu0 %v261
    %1011 = vmatpush.msra.mxu0 %v257
    %1012 = vmatpush.msra.mxu0 %v253
    %1013 = vmatpush.msra.mxu0 %v249
    %1014 = vmatpush.msra.mxu0 %v245
    %1015 = vmatpush.msra.mxu0 %v241
    %1016 = vmatpush.msra.mxu0 %v237
    %1017 = vmatpush.msra.mxu0 %v233
    %1018 = vmatpush.msra.mxu0 %v229
    %1019 = vmatpush.msra.mxu0 %v225
    %1020 = vmatpush.msra.mxu0 %v221
    %1021 = vmatpush.msra.mxu0 %v217
    %1022 = vmatpush.msra.mxu0 %v213
    %1023 = vmatpush.msra.mxu0 %v209
    %1024 = vmatpush.msra.mxu0 %v205
    %1025 = vmatmul.f32.gmra.mxu0 %v961
    %v1026 = vpop.f32.mrf.mxu0
    %v1027 = vadd.f32 0.0, %v1026
    %1028 = vdwg.mxu0
    %1029 = vmatpush.msra.mxu0 %v266
    %1030 = vmatpush.msra.mxu0 %v262
    %1031 = vmatpush.msra.mxu0 %v258
    %1032 = vmatpush.msra.mxu0 %v254
    %1033 = vmatpush.msra.mxu0 %v250
    %1034 = vmatpush.msra.mxu0 %v246
    %1035 = vmatpush.msra.mxu0 %v242
    %1036 = vmatpush.msra.mxu0 %v238
    %1037 = vmatpush.msra.mxu0 %v234
    %1038 = vmatpush.msra.mxu0 %v230
    %1039 = vmatpush.msra.mxu0 %v226
    %1040 = vmatpush.msra.mxu0 %v222
    %1041 = vmatpush.msra.mxu0 %v218
    %1042 = vmatpush.msra.mxu0 %v214
    %1043 = vmatpush.msra.mxu0 %v210
    %1044 = vmatpush.msra.mxu0 %v206
    %1045 = vmatmul.f32.gmra.mxu0 %v961
    %v1046 = vpop.f32.mrf.mxu0
    %v1047 = vadd.f32 0.0, %v1046
    %1048 = vdwg.mxu0
    %v1049 = vadd.f32 %v965, %v987
    %v1050 = vadd.f32 %v966, %v1007
    %v1051 = vadd.f32 %v967, %v1027
    %v1052 = vadd.f32 %v968, %v1047
    %v1053 = vmul.f32 %v1049, 0.5
    %v1054 = vtanh.pop %v1053
    %v1055 = vmul.f32 %v1054, 0.5
    %v1056 = vadd.f32 %v1055, 0.5
    %v1057 = vmul.f32 %v1050, 0.5
    %v1058 = vtanh.pop %v1057
    %v1059 = vmul.f32 %v1058, 0.5
    %v1060 = vadd.f32 %v1059, 0.5
    %v1061 = vtanh.pop %v1051
    %v1062 = vmul.f32 %v1052, 0.5
    %v1063 = vtanh.pop %v1062
    %v1064 = vmul.f32 %v1063, 0.5
    %v1065 = vadd.f32 %v1064, 0.5
    %v1066 = vmul.f32 %v1060, %v959
    %v1067 = vmul.f32 %v1056, %v1061
    %v1068 = vadd.f32 %v1066, %v1067
    %v1069 = vtanh.pop %v1068
    %v1070 = vmul.f32 %v1065, %v1069
    %s1071 = smul.u32 3, 4
    %s1072 = smul.addr %s1071, 8
    %s1073 = scalar_lea.vmem [#allocation3], %s1072
    %v1074 = vld [vmem:[%s1073] sm:$0xff]
    %v1075 = vld [vmem:[%s1073 + $0x8] sm:$0xff]
    %v1076 = vld [vmem:[%s1073 + $0x10] sm:$0xff]
    %v1077 = vld [vmem:[%s1073 + $0x18] sm:$0xff]
    %1078 = vmatpush.msra.mxu0 %v263
    %1079 = vmatpush.msra.mxu0 %v259
    %1080 = vmatpush.msra.mxu0 %v255
    %1081 = vmatpush.msra.mxu0 %v251
    %1082 = vmatpush.msra.mxu0 %v247
    %1083 = vmatpush.msra.mxu0 %v243
    %1084 = vmatpush.msra.mxu0 %v239
    %1085 = vmatpush.msra.mxu0 %v235
    %1086 = vmatpush.msra.mxu0 %v231
    %1087 = vmatpush.msra.mxu0 %v227
    %1088 = vmatpush.msra.mxu0 %v223
    %1089 = vmatpush.msra.mxu0 %v219
    %1090 = vmatpush.msra.mxu0 %v215
    %1091 = vmatpush.msra.mxu0 %v211
    %1092 = vmatpush.msra.mxu0 %v207
    %1093 = vmatpush.msra.mxu0 %v203
    %1094 = vmatmul.f32.gmra.mxu0 %v1070
    %v1095 = vpop.f32.mrf.mxu0
    %v1096 = vadd.f32 0.0, %v1095
    %1097 = vdwg.mxu0
    %1098 = vmatpush.msra.mxu0 %v264
    %1099 = vmatpush.msra.mxu0 %v260
    %1100 = vmatpush.msra.mxu0 %v256
    %1101 = vmatpush.msra.mxu0 %v252
    %1102 = vmatpush.msra.mxu0 %v248
    %1103 = vmatpush.msra.mxu0 %v244
    %1104 = vmatpush.msra.mxu0 %v240
    %1105 = vmatpush.msra.mxu0 %v236
    %1106 = vmatpush.msra.mxu0 %v232
    %1107 = vmatpush.msra.mxu0 %v228
    %1108 = vmatpush.msra.mxu0 %v224
    %1109 = vmatpush.msra.mxu0 %v220
    %1110 = vmatpush.msra.mxu0 %v216
    %1111 = vmatpush.msra.mxu0 %v212
    %1112 = vmatpush.msra.mxu0 %v208
    %1113 = vmatpush.msra.mxu0 %v204
    %1114 = vmatmul.f32.gmra.mxu0 %v1070
    %v1115 = vpop.f32.mrf.mxu0
    %v1116 = vadd.f32 0.0, %v1115
    %1117 = vdwg.mxu0
    %1118 = vmatpush.msra.mxu0 %v265
    %1119 = vmatpush.msra.mxu0 %v261
    %1120 = vmatpush.msra.mxu0 %v257
    %1121 = vmatpush.msra.mxu0 %v253
    %1122 = vmatpush.msra.mxu0 %v249
    %1123 = vmatpush.msra.mxu0 %v245
    %1124 = vmatpush.msra.mxu0 %v241
    %1125 = vmatpush.msra.mxu0 %v237
    %1126 = vmatpush.msra.mxu0 %v233
    %1127 = vmatpush.msra.mxu0 %v229
    %1128 = vmatpush.msra.mxu0 %v225
    %1129 = vmatpush.msra.mxu0 %v221
    %1130 = vmatpush.msra.mxu0 %v217
    %1131 = vmatpush.msra.mxu0 %v213
    %1132 = vmatpush.msra.mxu0 %v209
    %1133 = vmatpush.msra.mxu0 %v205
    %1134 = vmatmul.f32.gmra.mxu0 %v1070
    %v1135 = vpop.f32.mrf.mxu0
    %v1136 = vadd.f32 0.0, %v1135
    %1137 = vdwg.mxu0
    %1138 = vmatpush.msra.mxu0 %v266
    %1139 = vmatpush.msra.mxu0 %v262
    %1140 = vmatpush.msra.mxu0 %v258
    %1141 = vmatpush.msra.mxu0 %v254
    %1142 = vmatpush.msra.mxu0 %v250
    %1143 = vmatpush.msra.mxu0 %v246
    %1144 = vmatpush.msra.mxu0 %v242
    %1145 = vmatpush.msra.mxu0 %v238
    %1146 = vmatpush.msra.mxu0 %v234
    %1147 = vmatpush.msra.mxu0 %v230
    %1148 = vmatpush.msra.mxu0 %v226
    %1149 = vmatpush.msra.mxu0 %v222
    %1150 = vmatpush.msra.mxu0 %v218
    %1151 = vmatpush.msra.mxu0 %v214
    %1152 = vmatpush.msra.mxu0 %v210
    %1153 = vmatpush.msra.mxu0 %v206
    %1154 = vmatmul.f32.gmra.mxu0 %v1070
    %v1155 = vpop.f32.mrf.mxu0
    %v1156 = vadd.f32 0.0, %v1155
    %1157 = vdwg.mxu0
    %v1158 = vadd.f32 %v1074, %v1096
    %v1159 = vadd.f32 %v1075, %v1116
    %v1160 = vadd.f32 %v1076, %v1136
    %v1161 = vadd.f32 %v1077, %v1156
    %v1162 = vmul.f32 %v1158, 0.5
    %v1163 = vtanh.pop %v1162
    %v1164 = vmul.f32 %v1163, 0.5
    %v1165 = vadd.f32 %v1164, 0.5
    %v1166 = vmul.f32 %v1159, 0.5
    %v1167 = vtanh.pop %v1166
    %v1168 = vmul.f32 %v1167, 0.5
    %v1169 = vadd.f32 %v1168, 0.5
    %v1170 = vtanh.pop %v1160
    %v1171 = vmul.f32 %v1161, 0.5
    %v1172 = vtanh.pop %v1171
    %v1173 = vmul.f32 %v1172, 0.5
    %v1174 = vadd.f32 %v1173, 0.5
    %v1175 = vmul.f32 %v1169, %v1068
    %v1176 = vmul.f32 %v1165, %v1170
    %v1177 = vadd.f32 %v1175, %v1176
    %v1178 = vtanh.pop %v1177
    %v1179 = vmul.f32 %v1174, %v1178
    %s1180 = smul.u32 4, 4
    %s1181 = smul.addr %s1180, 8
    %s1182 = scalar_lea.vmem [#allocation3], %s1181
    %v1183 = vld [vmem:[%s1182] sm:$0xff]
    %v1184 = vld [vmem:[%s1182 + $0x8] sm:$0xff]
    %v1185 = vld [vmem:[%s1182 + $0x10] sm:$0xff]
    %v1186 = vld [vmem:[%s1182 + $0x18] sm:$0xff]
    %1187 = vmatpush.msra.mxu0 %v263
    %1188 = vmatpush.msra.mxu0 %v259
    %1189 = vmatpush.msra.mxu0 %v255
    %1190 = vmatpush.msra.mxu0 %v251
    %1191 = vmatpush.msra.mxu0 %v247
    %1192 = vmatpush.msra.mxu0 %v243
    %1193 = vmatpush.msra.mxu0 %v239
    %1194 = vmatpush.msra.mxu0 %v235
    %1195 = vmatpush.msra.mxu0 %v231
    %1196 = vmatpush.msra.mxu0 %v227
    %1197 = vmatpush.msra.mxu0 %v223
    %1198 = vmatpush.msra.mxu0 %v219
    %1199 = vmatpush.msra.mxu0 %v215
    %1200 = vmatpush.msra.mxu0 %v211
    %1201 = vmatpush.msra.mxu0 %v207
    %1202 = vmatpush.msra.mxu0 %v203
    %1203 = vmatmul.f32.gmra.mxu0 %v1179
    %v1204 = vpop.f32.mrf.mxu0
    %v1205 = vadd.f32 0.0, %v1204
    %1206 = vdwg.mxu0
    %1207 = vmatpush.msra.mxu0 %v264
    %1208 = vmatpush.msra.mxu0 %v260
    %1209 = vmatpush.msra.mxu0 %v256
    %1210 = vmatpush.msra.mxu0 %v252
    %1211 = vmatpush.msra.mxu0 %v248
    %1212 = vmatpush.msra.mxu0 %v244
    %1213 = vmatpush.msra.mxu0 %v240
    %1214 = vmatpush.msra.mxu0 %v236
    %1215 = vmatpush.msra.mxu0 %v232
    %1216 = vmatpush.msra.mxu0 %v228
    %1217 = vmatpush.msra.mxu0 %v224
    %1218 = vmatpush.msra.mxu0 %v220
    %1219 = vmatpush.msra.mxu0 %v216
    %1220 = vmatpush.msra.mxu0 %v212
    %1221 = vmatpush.msra.mxu0 %v208
    %1222 = vmatpush.msra.mxu0 %v204
    %1223 = vmatmul.f32.gmra.mxu0 %v1179
    %v1224 = vpop.f32.mrf.mxu0
    %v1225 = vadd.f32 0.0, %v1224
    %1226 = vdwg.mxu0
    %1227 = vmatpush.msra.mxu0 %v265
    %1228 = vmatpush.msra.mxu0 %v261
    %1229 = vmatpush.msra.mxu0 %v257
    %1230 = vmatpush.msra.mxu0 %v253
    %1231 = vmatpush.msra.mxu0 %v249
    %1232 = vmatpush.msra.mxu0 %v245
    %1233 = vmatpush.msra.mxu0 %v241
    %1234 = vmatpush.msra.mxu0 %v237
    %1235 = vmatpush.msra.mxu0 %v233
    %1236 = vmatpush.msra.mxu0 %v229
    %1237 = vmatpush.msra.mxu0 %v225
    %1238 = vmatpush.msra.mxu0 %v221
    %1239 = vmatpush.msra.mxu0 %v217
    %1240 = vmatpush.msra.mxu0 %v213
    %1241 = vmatpush.msra.mxu0 %v209
    %1242 = vmatpush.msra.mxu0 %v205
    %1243 = vmatmul.f32.gmra.mxu0 %v1179
    %v1244 = vpop.f32.mrf.mxu0
    %v1245 = vadd.f32 0.0, %v1244
    %1246 = vdwg.mxu0
    %1247 = vmatpush.msra.mxu0 %v266
    %1248 = vmatpush.msra.mxu0 %v262
    %1249 = vmatpush.msra.mxu0 %v258
    %1250 = vmatpush.msra.mxu0 %v254
    %1251 = vmatpush.msra.mxu0 %v250
    %1252 = vmatpush.msra.mxu0 %v246
    %1253 = vmatpush.msra.mxu0 %v242
    %1254 = vmatpush.msra.mxu0 %v238
    %1255 = vmatpush.msra.mxu0 %v234
    %1256 = vmatpush.msra.mxu0 %v230
    %1257 = vmatpush.msra.mxu0 %v226
    %1258 = vmatpush.msra.mxu0 %v222
    %1259 = vmatpush.msra.mxu0 %v218
    %1260 = vmatpush.msra.mxu0 %v214
    %1261 = vmatpush.msra.mxu0 %v210
    %1262 = vmatpush.msra.mxu0 %v206
    %1263 = vmatmul.f32.gmra.mxu0 %v1179
    %v1264 = vpop.f32.mrf.mxu0
    %v1265 = vadd.f32 0.0, %v1264
    %1266 = vdwg.mxu0
    %v1267 = vadd.f32 %v1183, %v1205
    %v1268 = vadd.f32 %v1184, %v1225
    %v1269 = vadd.f32 %v1185, %v1245
    %v1270 = vadd.f32 %v1186, %v1265
    %v1271 = vmul.f32 %v1267, 0.5
    %v1272 = vtanh.pop %v1271
    %v1273 = vmul.f32 %v1272, 0.5
    %v1274 = vadd.f32 %v1273, 0.5
    %v1275 = vmul.f32 %v1268, 0.5
    %v1276 = vtanh.pop %v1275
    %v1277 = vmul.f32 %v1276, 0.5
    %v1278 = vadd.f32 %v1277, 0.5
    %v1279 = vtanh.pop %v1269
    %v1280 = vmul.f32 %v1270, 0.5
    %v1281 = vtanh.pop %v1280
    %v1282 = vmul.f32 %v1281, 0.5
    %v1283 = vadd.f32 %v1282, 0.5
    %v1284 = vmul.f32 %v1278, %v1177
    %v1285 = vmul.f32 %v1274, %v1279
    %v1286 = vadd.f32 %v1284, %v1285
    %v1287 = vtanh.pop %v1286
    %v1288 = vmul.f32 %v1283, %v1287
    %s1289 = smul.u32 5, 4
    %s1290 = smul.addr %s1289, 8
    %s1291 = scalar_lea.vmem [#allocation3], %s1290
    %v1292 = vld [vmem:[%s1291] sm:$0xff]
    %v1293 = vld [vmem:[%s1291 + $0x8] sm:$0xff]
    %v1294 = vld [vmem:[%s1291 + $0x10] sm:$0xff]
    %v1295 = vld [vmem:[%s1291 + $0x18] sm:$0xff]
    %1296 = vmatpush.msra.mxu0 %v263
    %1297 = vmatpush.msra.mxu0 %v259
    %1298 = vmatpush.msra.mxu0 %v255
    %1299 = vmatpush.msra.mxu0 %v251
    %1300 = vmatpush.msra.mxu0 %v247
    %1301 = vmatpush.msra.mxu0 %v243
    %1302 = vmatpush.msra.mxu0 %v239
    %1303 = vmatpush.msra.mxu0 %v235
    %1304 = vmatpush.msra.mxu0 %v231
    %1305 = vmatpush.msra.mxu0 %v227
    %1306 = vmatpush.msra.mxu0 %v223
    %1307 = vmatpush.msra.mxu0 %v219
    %1308 = vmatpush.msra.mxu0 %v215
    %1309 = vmatpush.msra.mxu0 %v211
    %1310 = vmatpush.msra.mxu0 %v207
    %1311 = vmatpush.msra.mxu0 %v203
    %1312 = vmatmul.f32.gmra.mxu0 %v1288
    %v1313 = vpop.f32.mrf.mxu0
    %v1314 = vadd.f32 0.0, %v1313
    %1315 = vdwg.mxu0
    %1316 = vmatpush.msra.mxu0 %v264
    %1317 = vmatpush.msra.mxu0 %v260
    %1318 = vmatpush.msra.mxu0 %v256
    %1319 = vmatpush.msra.mxu0 %v252
    %1320 = vmatpush.msra.mxu0 %v248
    %1321 = vmatpush.msra.mxu0 %v244
    %1322 = vmatpush.msra.mxu0 %v240
    %1323 = vmatpush.msra.mxu0 %v236
    %1324 = vmatpush.msra.mxu0 %v232
    %1325 = vmatpush.msra.mxu0 %v228
    %1326 = vmatpush.msra.mxu0 %v224
    %1327 = vmatpush.msra.mxu0 %v220
    %1328 = vmatpush.msra.mxu0 %v216
    %1329 = vmatpush.msra.mxu0 %v212
    %1330 = vmatpush.msra.mxu0 %v208
    %1331 = vmatpush.msra.mxu0 %v204
    %1332 = vmatmul.f32.gmra.mxu0 %v1288
    %v1333 = vpop.f32.mrf.mxu0
    %v1334 = vadd.f32 0.0, %v1333
    %1335 = vdwg.mxu0
    %1336 = vmatpush.msra.mxu0 %v265
    %1337 = vmatpush.msra.mxu0 %v261
    %1338 = vmatpush.msra.mxu0 %v257
    %1339 = vmatpush.msra.mxu0 %v253
    %1340 = vmatpush.msra.mxu0 %v249
    %1341 = vmatpush.msra.mxu0 %v245
    %1342 = vmatpush.msra.mxu0 %v241
    %1343 = vmatpush.msra.mxu0 %v237
    %1344 = vmatpush.msra.mxu0 %v233
    %1345 = vmatpush.msra.mxu0 %v229
    %1346 = vmatpush.msra.mxu0 %v225
    %1347 = vmatpush.msra.mxu0 %v221
    %1348 = vmatpush.msra.mxu0 %v217
    %1349 = vmatpush.msra.mxu0 %v213
    %1350 = vmatpush.msra.mxu0 %v209
    %1351 = vmatpush.msra.mxu0 %v205
    %1352 = vmatmul.f32.gmra.mxu0 %v1288
    %v1353 = vpop.f32.mrf.mxu0
    %v1354 = vadd.f32 0.0, %v1353
    %1355 = vdwg.mxu0
    %1356 = vmatpush.msra.mxu0 %v266
    %1357 = vmatpush.msra.mxu0 %v262
    %1358 = vmatpush.msra.mxu0 %v258
    %1359 = vmatpush.msra.mxu0 %v254
    %1360 = vmatpush.msra.mxu0 %v250
    %1361 = vmatpush.msra.mxu0 %v246
    %1362 = vmatpush.msra.mxu0 %v242
    %1363 = vmatpush.msra.mxu0 %v238
    %1364 = vmatpush.msra.mxu0 %v234
    %1365 = vmatpush.msra.mxu0 %v230
    %1366 = vmatpush.msra.mxu0 %v226
    %1367 = vmatpush.msra.mxu0 %v222
    %1368 = vmatpush.msra.mxu0 %v218
    %1369 = vmatpush.msra.mxu0 %v214
    %1370 = vmatpush.msra.mxu0 %v210
    %1371 = vmatpush.msra.mxu0 %v206
    %1372 = vmatmul.f32.gmra.mxu0 %v1288
    %v1373 = vpop.f32.mrf.mxu0
    %v1374 = vadd.f32 0.0, %v1373
    %1375 = vdwg.mxu0
    %v1376 = vadd.f32 %v1292, %v1314
    %v1377 = vadd.f32 %v1293, %v1334
    %v1378 = vadd.f32 %v1294, %v1354
    %v1379 = vadd.f32 %v1295, %v1374
    %v1380 = vmul.f32 %v1376, 0.5
    %v1381 = vtanh.pop %v1380
    %v1382 = vmul.f32 %v1381, 0.5
    %v1383 = vadd.f32 %v1382, 0.5
    %v1384 = vmul.f32 %v1377, 0.5
    %v1385 = vtanh.pop %v1384
    %v1386 = vmul.f32 %v1385, 0.5
    %v1387 = vadd.f32 %v1386, 0.5
    %v1388 = vtanh.pop %v1378
    %v1389 = vmul.f32 %v1379, 0.5
    %v1390 = vtanh.pop %v1389
    %v1391 = vmul.f32 %v1390, 0.5
    %v1392 = vadd.f32 %v1391, 0.5
    %v1393 = vmul.f32 %v1387, %v1286
    %v1394 = vmul.f32 %v1383, %v1388
    %v1395 = vadd.f32 %v1393, %v1394
    %v1396 = vtanh.pop %v1395
    %v1397 = vmul.f32 %v1392, %v1396
    %s1398 = smul.u32 6, 4
    %s1399 = smul.addr %s1398, 8
    %s1400 = scalar_lea.vmem [#allocation3], %s1399
    %v1401 = vld [vmem:[%s1400] sm:$0xff]
    %v1402 = vld [vmem:[%s1400 + $0x8] sm:$0xff]
    %v1403 = vld [vmem:[%s1400 + $0x10] sm:$0xff]
    %v1404 = vld [vmem:[%s1400 + $0x18] sm:$0xff]
    %1405 = vmatpush.msra.mxu0 %v263
    %1406 = vmatpush.msra.mxu0 %v259
    %1407 = vmatpush.msra.mxu0 %v255
    %1408 = vmatpush.msra.mxu0 %v251
    %1409 = vmatpush.msra.mxu0 %v247
    %1410 = vmatpush.msra.mxu0 %v243
    %1411 = vmatpush.msra.mxu0 %v239
    %1412 = vmatpush.msra.mxu0 %v235
    %1413 = vmatpush.msra.mxu0 %v231
    %1414 = vmatpush.msra.mxu0 %v227
    %1415 = vmatpush.msra.mxu0 %v223
    %1416 = vmatpush.msra.mxu0 %v219
    %1417 = vmatpush.msra.mxu0 %v215
    %1418 = vmatpush.msra.mxu0 %v211
    %1419 = vmatpush.msra.mxu0 %v207
    %1420 = vmatpush.msra.mxu0 %v203
    %1421 = vmatmul.f32.gmra.mxu0 %v1397
    %v1422 = vpop.f32.mrf.mxu0
    %v1423 = vadd.f32 0.0, %v1422
    %1424 = vdwg.mxu0
    %1425 = vmatpush.msra.mxu0 %v264
    %1426 = vmatpush.msra.mxu0 %v260
    %1427 = vmatpush.msra.mxu0 %v256
    %1428 = vmatpush.msra.mxu0 %v252
    %1429 = vmatpush.msra.mxu0 %v248
    %1430 = vmatpush.msra.mxu0 %v244
    %1431 = vmatpush.msra.mxu0 %v240
    %1432 = vmatpush.msra.mxu0 %v236
    %1433 = vmatpush.msra.mxu0 %v232
    %1434 = vmatpush.msra.mxu0 %v228
    %1435 = vmatpush.msra.mxu0 %v224
    %1436 = vmatpush.msra.mxu0 %v220
    %1437 = vmatpush.msra.mxu0 %v216
    %1438 = vmatpush.msra.mxu0 %v212
    %1439 = vmatpush.msra.mxu0 %v208
    %1440 = vmatpush.msra.mxu0 %v204
    %1441 = vmatmul.f32.gmra.mxu0 %v1397
    %v1442 = vpop.f32.mrf.mxu0
    %v1443 = vadd.f32 0.0, %v1442
    %1444 = vdwg.mxu0
    %1445 = vmatpush.msra.mxu0 %v265
    %1446 = vmatpush.msra.mxu0 %v261
    %1447 = vmatpush.msra.mxu0 %v257
    %1448 = vmatpush.msra.mxu0 %v253
    %1449 = vmatpush.msra.mxu0 %v249
    %1450 = vmatpush.msra.mxu0 %v245
    %1451 = vmatpush.msra.mxu0 %v241
    %1452 = vmatpush.msra.mxu0 %v237
    %1453 = vmatpush.msra.mxu0 %v233
    %1454 = vmatpush.msra.mxu0 %v229
    %1455 = vmatpush.msra.mxu0 %v225
    %1456 = vmatpush.msra.mxu0 %v221
    %1457 = vmatpush.msra.mxu0 %v217
    %1458 = vmatpush.msra.mxu0 %v213
    %1459 = vmatpush.msra.mxu0 %v209
    %1460 = vmatpush.msra.mxu0 %v205
    %1461 = vmatmul.f32.gmra.mxu0 %v1397
    %v1462 = vpop.f32.mrf.mxu0
    %v1463 = vadd.f32 0.0, %v1462
    %1464 = vdwg.mxu0
    %1465 = vmatpush.msra.mxu0 %v266
    %1466 = vmatpush.msra.mxu0 %v262
    %1467 = vmatpush.msra.mxu0 %v258
    %1468 = vmatpush.msra.mxu0 %v254
    %1469 = vmatpush.msra.mxu0 %v250
    %1470 = vmatpush.msra.mxu0 %v246
    %1471 = vmatpush.msra.mxu0 %v242
    %1472 = vmatpush.msra.mxu0 %v238
    %1473 = vmatpush.msra.mxu0 %v234
    %1474 = vmatpush.msra.mxu0 %v230
    %1475 = vmatpush.msra.mxu0 %v226
    %1476 = vmatpush.msra.mxu0 %v222
    %1477 = vmatpush.msra.mxu0 %v218
    %1478 = vmatpush.msra.mxu0 %v214
    %1479 = vmatpush.msra.mxu0 %v210
    %1480 = vmatpush.msra.mxu0 %v206
    %1481 = vmatmul.f32.gmra.mxu0 %v1397
    %v1482 = vpop.f32.mrf.mxu0
    %v1483 = vadd.f32 0.0, %v1482
    %1484 = vdwg.mxu0
    %v1485 = vadd.f32 %v1401, %v1423
    %v1486 = vadd.f32 %v1402, %v1443
    %v1487 = vadd.f32 %v1403, %v1463
    %v1488 = vadd.f32 %v1404, %v1483
    %v1489 = vmul.f32 %v1485, 0.5
    %v1490 = vtanh.pop %v1489
    %v1491 = vmul.f32 %v1490, 0.5
    %v1492 = vadd.f32 %v1491, 0.5
    %v1493 = vmul.f32 %v1486, 0.5
    %v1494 = vtanh.pop %v1493
    %v1495 = vmul.f32 %v1494, 0.5
    %v1496 = vadd.f32 %v1495, 0.5
    %v1497 = vtanh.pop %v1487
    %v1498 = vmul.f32 %v1488, 0.5
    %v1499 = vtanh.pop %v1498
    %v1500 = vmul.f32 %v1499, 0.5
    %v1501 = vadd.f32 %v1500, 0.5
    %v1502 = vmul.f32 %v1496, %v1395
    %v1503 = vmul.f32 %v1492, %v1497
    %v1504 = vadd.f32 %v1502, %v1503
    %v1505 = vtanh.pop %v1504
    %v1506 = vmul.f32 %v1501, %v1505
    %s1507 = smul.u32 7, 4
    %s1508 = smul.addr %s1507, 8
    %s1509 = scalar_lea.vmem [#allocation3], %s1508
    %v1510 = vld [vmem:[%s1509] sm:$0xff]
    %v1511 = vld [vmem:[%s1509 + $0x8] sm:$0xff]
    %v1512 = vld [vmem:[%s1509 + $0x10] sm:$0xff]
    %v1513 = vld [vmem:[%s1509 + $0x18] sm:$0xff]
    %1514 = vmatpush.msra.mxu0 %v263
    %1515 = vmatpush.msra.mxu0 %v259
    %1516 = vmatpush.msra.mxu0 %v255
    %1517 = vmatpush.msra.mxu0 %v251
    %1518 = vmatpush.msra.mxu0 %v247
    %1519 = vmatpush.msra.mxu0 %v243
    %1520 = vmatpush.msra.mxu0 %v239
    %1521 = vmatpush.msra.mxu0 %v235
    %1522 = vmatpush.msra.mxu0 %v231
    %1523 = vmatpush.msra.mxu0 %v227
    %1524 = vmatpush.msra.mxu0 %v223
    %1525 = vmatpush.msra.mxu0 %v219
    %1526 = vmatpush.msra.mxu0 %v215
    %1527 = vmatpush.msra.mxu0 %v211
    %1528 = vmatpush.msra.mxu0 %v207
    %1529 = vmatpush.msra.mxu0 %v203
    %1530 = vmatmul.f32.gmra.mxu0 %v1506
    %v1531 = vpop.f32.mrf.mxu0
    %v1532 = vadd.f32 0.0, %v1531
    %1533 = vdwg.mxu0
    %1534 = vmatpush.msra.mxu0 %v264
    %1535 = vmatpush.msra.mxu0 %v260
    %1536 = vmatpush.msra.mxu0 %v256
    %1537 = vmatpush.msra.mxu0 %v252
    %1538 = vmatpush.msra.mxu0 %v248
    %1539 = vmatpush.msra.mxu0 %v244
    %1540 = vmatpush.msra.mxu0 %v240
    %1541 = vmatpush.msra.mxu0 %v236
    %1542 = vmatpush.msra.mxu0 %v232
    %1543 = vmatpush.msra.mxu0 %v228
    %1544 = vmatpush.msra.mxu0 %v224
    %1545 = vmatpush.msra.mxu0 %v220
    %1546 = vmatpush.msra.mxu0 %v216
    %1547 = vmatpush.msra.mxu0 %v212
    %1548 = vmatpush.msra.mxu0 %v208
    %1549 = vmatpush.msra.mxu0 %v204
    %1550 = vmatmul.f32.gmra.mxu0 %v1506
    %v1551 = vpop.f32.mrf.mxu0
    %v1552 = vadd.f32 0.0, %v1551
    %1553 = vdwg.mxu0
    %1554 = vmatpush.msra.mxu0 %v265
    %1555 = vmatpush.msra.mxu0 %v261
    %1556 = vmatpush.msra.mxu0 %v257
    %1557 = vmatpush.msra.mxu0 %v253
    %1558 = vmatpush.msra.mxu0 %v249
    %1559 = vmatpush.msra.mxu0 %v245
    %1560 = vmatpush.msra.mxu0 %v241
    %1561 = vmatpush.msra.mxu0 %v237
    %1562 = vmatpush.msra.mxu0 %v233
    %1563 = vmatpush.msra.mxu0 %v229
    %1564 = vmatpush.msra.mxu0 %v225
    %1565 = vmatpush.msra.mxu0 %v221
    %1566 = vmatpush.msra.mxu0 %v217
    %1567 = vmatpush.msra.mxu0 %v213
    %1568 = vmatpush.msra.mxu0 %v209
    %1569 = vmatpush.msra.mxu0 %v205
    %1570 = vmatmul.f32.gmra.mxu0 %v1506
    %v1571 = vpop.f32.mrf.mxu0
    %v1572 = vadd.f32 0.0, %v1571
    %1573 = vdwg.mxu0
    %1574 = vmatpush.msra.mxu0 %v266
    %1575 = vmatpush.msra.mxu0 %v262
    %1576 = vmatpush.msra.mxu0 %v258
    %1577 = vmatpush.msra.mxu0 %v254
    %1578 = vmatpush.msra.mxu0 %v250
    %1579 = vmatpush.msra.mxu0 %v246
    %1580 = vmatpush.msra.mxu0 %v242
    %1581 = vmatpush.msra.mxu0 %v238
    %1582 = vmatpush.msra.mxu0 %v234
    %1583 = vmatpush.msra.mxu0 %v230
    %1584 = vmatpush.msra.mxu0 %v226
    %1585 = vmatpush.msra.mxu0 %v222
    %1586 = vmatpush.msra.mxu0 %v218
    %1587 = vmatpush.msra.mxu0 %v214
    %1588 = vmatpush.msra.mxu0 %v210
    %1589 = vmatpush.msra.mxu0 %v206
    %1590 = vmatmul.f32.gmra.mxu0 %v1506
    %v1591 = vpop.f32.mrf.mxu0
    %v1592 = vadd.f32 0.0, %v1591
    %1593 = vdwg.mxu0
    %v1594 = vadd.f32 %v1510, %v1532
    %v1595 = vadd.f32 %v1511, %v1552
    %v1596 = vadd.f32 %v1512, %v1572
    %v1597 = vadd.f32 %v1513, %v1592
    %v1598 = vmul.f32 %v1594, 0.5
    %v1599 = vtanh.pop %v1598
    %v1600 = vmul.f32 %v1599, 0.5
    %v1601 = vadd.f32 %v1600, 0.5
    %v1602 = vmul.f32 %v1595, 0.5
    %v1603 = vtanh.pop %v1602
    %v1604 = vmul.f32 %v1603, 0.5
    %v1605 = vadd.f32 %v1604, 0.5
    %v1606 = vtanh.pop %v1596
    %v1607 = vmul.f32 %v1597, 0.5
    %v1608 = vtanh.pop %v1607
    %v1609 = vmul.f32 %v1608, 0.5
    %v1610 = vadd.f32 %v1609, 0.5
    %v1611 = vmul.f32 %v1605, %v1504
    %v1612 = vmul.f32 %v1601, %v1606
    %v1613 = vadd.f32 %v1611, %v1612
    %v1614 = vtanh.pop %v1613
    %v1615 = vmul.f32 %v1610, %v1614
    %v1616 = vld [vmem:[#allocation10] sm:$0xff]
    %v1617 = vld [vmem:[#allocation10 + $0x8] sm:$0xff]
    %v1618 = vld [vmem:[#allocation10 + $0x10] sm:$0xff]
    %v1619 = vld [vmem:[#allocation10 + $0x18] sm:$0xff]
    %v1620 = vld [vmem:[#allocation10 + $0x20] sm:$0xff]
    %v1621 = vld [vmem:[#allocation10 + $0x28] sm:$0xff]
    %v1622 = vld [vmem:[#allocation10 + $0x30] sm:$0xff]
    %v1623 = vld [vmem:[#allocation10 + $0x38] sm:$0xff]
    %v1624 = vld [vmem:[#allocation10 + $0x40] sm:$0xff]
    %v1625 = vld [vmem:[#allocation10 + $0x48] sm:$0xff]
    %v1626 = vld [vmem:[#allocation10 + $0x50] sm:$0xff]
    %v1627 = vld [vmem:[#allocation10 + $0x58] sm:$0xff]
    %v1628 = vld [vmem:[#allocation10 + $0x60] sm:$0xff]
    %v1629 = vld [vmem:[#allocation10 + $0x68] sm:$0xff]
    %v1630 = vld [vmem:[#allocation10 + $0x70] sm:$0xff]
    %v1631 = vld [vmem:[#allocation10 + $0x78] sm:$0xff]
    %v1632 = vld [vmem:[%s8] sm:$0x1]
    %v1634 = vperm.slane %v1632, 0
    %1636 = vmatpush.msra.mxu0 %v1631
    %1637 = vmatpush.msra.mxu0 %v1630
    %1638 = vmatpush.msra.mxu0 %v1629
    %1639 = vmatpush.msra.mxu0 %v1628
    %1640 = vmatpush.msra.mxu0 %v1627
    %1641 = vmatpush.msra.mxu0 %v1626
    %1642 = vmatpush.msra.mxu0 %v1625
    %1643 = vmatpush.msra.mxu0 %v1624
    %1644 = vmatpush.msra.mxu0 %v1623
    %1645 = vmatpush.msra.mxu0 %v1622
    %1646 = vmatpush.msra.mxu0 %v1621
    %1647 = vmatpush.msra.mxu0 %v1620
    %1648 = vmatpush.msra.mxu0 %v1619
    %1649 = vmatpush.msra.mxu0 %v1618
    %1650 = vmatpush.msra.mxu0 %v1617
    %1651 = vmatpush.msra.mxu0 %v1616
    %1652 = vmatmul.f32.gmra.mxu0 %v1615
    %v1653 = vpop.f32.mrf.mxu0
    %v1654 = vadd.f32 %v1634, %v1653
    %1655 = vdwg.mxu0
    %1656 = vst [vmem:[#allocation12] sm:$0xff] %v1654
    // Predicated region
    $region54: #{tpu_custom_call.1} parent=1 // pred_check
      _
    $region55: #{tpu_custom_call.1} parent=1 // pred_check_branch
      %1658 = sbr.rel (0) target = $region57
    $region56: #{tpu_custom_call.1} parent=1 // pred_region
      %1660 = vsyncadd [#allocation6], 0
      %s1662 = sshll.u32 [#allocation12], 4
      %s1663 = int_to_ptr.vmem [resolvable:$true] %s1662
      %s1664 = sshll.u32 %s9, 4
      %s1665 = int_to_ptr.hbm [resolvable:$true] %s1664
      %1667 = dma.vmem_to_hbm [thread:$0]  %s1663, 128, %s1665, [#allocation6]
    $region57: #{tpu_custom_call.1} parent=1 // pred_fallthru
      _
    // Predicated region
    $region58: #{tpu_custom_call.1} parent=1 // pred_check
      _
    $region59: #{tpu_custom_call.1} parent=1 // pred_check_branch
      %1669 = sbr.rel (0) target = $region61
    $region60: #{tpu_custom_call.1} parent=1 // pred_region
      %1671 = dma.done [#allocation6], 128
    $region61: #{tpu_custom_call.1} parent=1 // pred_fallthru
      _
    %1672 = vsyncpa [#allocation5], 1
    %1673 = vsyncpa [#allocation8], 1
    %1674 = vsyncpa [#allocation11], 1
    %1675 = vsyncpa [#allocation6], 1

</llo_original>
